<compile_context>
chip_gen: v7x
topology: tpu7x:2x2x1
jax: 0.10.0
libtpu: 0.0.40
codegen_flags: <defaults>
</compile_context>

<pallas_src>
import functools
import warnings

import jax
import jax.numpy as jnp
import numpy as np
from jax import lax
from jax.experimental import pallas as pl
from jax.experimental.pallas import tpu as pltpu

_LANE = 128


def _polyfit(fn, lo, hi, deg):
    xs = np.linspace(lo, hi, 4097, dtype=np.float64)
    with warnings.catch_warnings():
        warnings.simplefilter("ignore")
        return tuple(float(c) for c in np.polyfit(xs, fn(xs), deg))


# VPU-only softplus pieces (see _lut_softplus).  Coefficients derived once at import time in
# float64; absolute error of the assembled softplus < 1e-5, i.e. at most one 1/65536 table LSB
# at floor boundaries (same order as the HW-exp/log ulp effects the tolerance already covers).
_EXP_NEG_COEFFS = _polyfit(lambda v: np.exp(-v), 0.0, 1.0, 6)        # e^{-v},      v in [0, 1]
_LOG1P_COEFFS = _polyfit(lambda z: np.log1p(z) / z, 1e-9, 1.0, 7)    # log1p(z)/z,  z in [0, 1]


def _horner(coeffs, x):
    acc = coeffs[0]
    for c in coeffs[1:]:
        acc = acc * x + c
    return acc


def _lut_softplus(diff):
    """floor(log(1 + exp(-d/4096)) * 65536) / 65536 with d = min(floor(diff*4096), 32767).

    Synthesized stand-in for the 'soft_out_result' table entry / 2 (TODO(synk): real hex table
    not available).  Evaluated entirely on the VPU so the scan does not saturate the single
    EUP slot:  exp(-u) = (poly6(u/8))^8,  log1p(z) = z * poly7(z).
    """
    d_int = jnp.minimum(jnp.floor(diff * 4096.0), 32767.0)
    u = d_int * (1.0 / 4096.0)                        # [0, 8)
    p = _horner(_EXP_NEG_COEFFS, u * 0.125)           # e^{-u/8}
    p = p * p
    p = p * p
    z = p * p                                         # e^{-u} in (3.3e-4, 1]
    sp = z * _horner(_LOG1P_COEFFS, z)                # log(1 + e^{-u})
    return jnp.floor(sp * 65536.0) * (1.0 / 65536.0)


def _quant_params(bitwidth):
    fshift = 2.0 ** (bitwidth - 4)
    qmin_i = -(2.0 ** (bitwidth - 1))
    qmax_i = 2.0 ** (bitwidth - 1) - 1.0
    return fshift, qmin_i, qmax_i


def _logadd_step(s, t, acc_max):
    # One step of the quantized log-add scan (non-associative: table + per-step clamps).
    s_new = jnp.maximum(s, t) + _lut_softplus(jnp.abs(s - t))
    s_new = jnp.minimum(s_new, acc_max)
    return jnp.maximum(s_new, -8.0)


def _fused_kernel(x_ref, o_ref, *, bitwidth, k, unroll):
    # x_ref / o_ref: (k, r_blk, 128); whole N*C extent resident for this spatial tile.
    fshift, qmin_i, qmax_i = _quant_params(bitwidth)
    acc_max = qmax_i / fshift
    inv_fshift = 1.0 / fshift

    def scan_step(i, s):
        return _logadd_step(s, x_ref[i].astype(jnp.float32), acc_max)

    init = jnp.full(x_ref.shape[1:], -8.0, jnp.float32)
    lse = lax.fori_loop(0, k, scan_step, init, unroll=unroll)

    # Streamed epilogue: one (r_blk, 128) slice per iteration -- no full-block f32 temporaries,
    # stores trickle through the vst slot instead of bursting at the end.
    def epi_step(i, carry):
        y = x_ref[i].astype(jnp.float32) - lse
        q = jnp.clip(jnp.round(y * fshift), qmin_i, qmax_i) * inv_fshift
        o_ref[i] = q.astype(o_ref.dtype)
        return carry

    lax.fori_loop(0, k, epi_step, 0, unroll=unroll)


def _lse_kernel(x_ref, lse_ref, *, bitwidth, k_total, k_blk, unroll):
    # Split-path pass 1.  x_ref: (k_blk, r_blk, 128); lse_ref: (r_blk, 128) f32 accumulator,
    # resident across the trailing ("arbitrary") kk grid axis.
    fshift, _, qmax_i = _quant_params(bitwidth)
    acc_max = qmax_i / fshift
    kk = pl.program_id(1)

    @pl.when(kk == 0)
    def _():
        lse_ref[...] = jnp.full(lse_ref.shape, -8.0, jnp.float32)

    base = kk * k_blk

    def scan_step(i, s):
        s_new = _logadd_step(s, x_ref[i].astype(jnp.float32), acc_max)
        # Skip padded rows of the (possibly ragged) final N*C block.
        return jnp.where(base + i < k_total, s_new, s)

    lse_ref[...] = lax.fori_loop(0, k_blk, scan_step, lse_ref[...], unroll=unroll)


def _quantize_kernel(x_ref, lse_ref, o_ref, *, bitwidth, k_blk, unroll):
    # Split-path pass 2: out = fake_quant(x - lse), streamed one k slice at a time.
    fshift, qmin_i, qmax_i = _quant_params(bitwidth)
    inv_fshift = 1.0 / fshift
    lse = lse_ref[...]

    def step(i, carry):
        y = x_ref[i].astype(jnp.float32) - lse
        q = jnp.clip(jnp.round(y * fshift), qmin_i, qmax_i) * inv_fshift
        o_ref[i] = q.astype(o_ref.dtype)
        return carry

    lax.fori_loop(0, k_blk, step, 0, unroll=unroll)


def _unroll_for(nsteps):
    # Full unroll for short scans, partial unroll (LLO scheduling window) otherwise.
    return int(nsteps) if nsteps <= 16 else 8


def quantized_log_softmax(x, *, quant_output=True, bitwidth=8,
                          fused_block_cap_bytes=1 << 20, k_block=None):
    """Forward pass of QuantizedLogSoftmax.

    `k_block` forces the split (two-pass) path with the given N*C tile size; by default the
    fused single-kernel path is used whenever the whole N*C extent fits a ~1 MiB block.
    """
    assert bitwidth in (8, 16), f"bitwidth should be 8 or 16, got {bitwidth}"
    if not quant_output:
        # Non-quantized branch of the module is torch.nn.LogSoftmax(dim=1).
        return jax.nn.log_softmax(x, axis=1)

    assert x.ndim == 4, "expected NCHW input"
    n, c, h, w = x.shape
    k = n * c                  # joint batch*channel reduction axis (matches the .view(-1) quirk)
    l = h * w                  # independent spatial positions
    orig_dtype = x.dtype
    itemsize = jnp.dtype(orig_dtype).itemsize
    # TODO(synk): for bitwidth=16 with low-precision inputs (e.g. bf16) the 1/4096 output grid
    #             is not exactly representable after the final cast back to x.dtype.

    lp = ((l + _LANE - 1) // _LANE) * _LANE
    x2 = x.reshape(k, l)
    if lp != l:
        # Only needed when H*W is not lane-aligned; padded lanes are discarded afterwards.
        x2 = jnp.pad(x2, ((0, 0), (0, lp - l)))
    r = lp // _LANE
    x3 = x2.reshape(k, r, _LANE)

    def pick_rows(row_bytes, budget_bytes, vreg_rows):
        # Spatial rows per block: multiple of 8 (or the full extent), small enough that the
        # f32 loop-carry stays in a few vregs (no per-scan-step spills) and the block stays
        # under `budget_bytes`, and small enough to give >= 2 grid steps whenever possible
        # (megacore sharding on v7x + DMA/compute overlap).
        if r <= 8:
            return r           # tiny spatial extent: the full dim is the only legal block
        cap = min(vreg_rows, max(8, (budget_bytes // row_bytes) // 8 * 8))
        if r >= 16:
            cap = min(cap, max(8, (r // 2) // 8 * 8))
        return max(8, min(cap, (r // 8) * 8))

    vmem_limit = 32 * 1024 * 1024
    fused_ok = (k_block is None
                and k * min(r, 8) * _LANE * itemsize <= fused_block_cap_bytes)

    if fused_ok:
        r_blk = pick_rows(k * _LANE * itemsize, fused_block_cap_bytes, 64)
        out3 = pl.pallas_call(
            functools.partial(_fused_kernel, bitwidth=bitwidth, k=k, unroll=_unroll_for(k)),
            out_shape=jax.ShapeDtypeStruct((k, r, _LANE), orig_dtype),
            grid=(pl.cdiv(r, r_blk),),
            in_specs=[pl.BlockSpec((k, r_blk, _LANE), lambda j: (0, j, 0))],
            out_specs=pl.BlockSpec((k, r_blk, _LANE), lambda j: (0, j, 0)),
            compiler_params=pltpu.CompilerParams(
                dimension_semantics=("parallel",),
                vmem_limit_bytes=vmem_limit),
            cost_estimate=pl.CostEstimate(
                flops=50 * k * lp, transcendentals=0,
                bytes_accessed=2 * k * lp * itemsize),
        )(x3)
    else:
        # Split path: pass 1 reduces over N*C tiles (k axis last / "arbitrary", LSE resident in
        # the f32 output block), pass 2 re-reads x and applies the quantized subtraction.
        k_blk = 64 if k_block is None else int(k_block)
        k_blk = max(1, min(k, k_blk, max(1, (512 * 1024) // (8 * _LANE * itemsize))))
        r_blk = pick_rows(k_blk * _LANE * itemsize, 512 * 1024, 64)
        k_tiles = pl.cdiv(k, k_blk)
        r_tiles = pl.cdiv(r, r_blk)

        lse = pl.pallas_call(
            functools.partial(_lse_kernel, bitwidth=bitwidth, k_total=k, k_blk=k_blk,
                              unroll=_unroll_for(k_blk)),
            out_shape=jax.ShapeDtypeStruct((r, _LANE), jnp.float32),
            grid=(r_tiles, k_tiles),
            in_specs=[pl.BlockSpec((k_blk, r_blk, _LANE), lambda j, kk: (kk, j, 0))],
            out_specs=pl.BlockSpec((r_blk, _LANE), lambda j, kk: (j, 0)),
            compiler_params=pltpu.CompilerParams(
                dimension_semantics=("parallel", "arbitrary"),
                vmem_limit_bytes=vmem_limit),
            cost_estimate=pl.CostEstimate(
                flops=45 * k * lp, transcendentals=0,
                bytes_accessed=k * lp * itemsize + r * _LANE * 4),
        )(x3)

        out3 = pl.pallas_call(
            functools.partial(_quantize_kernel, bitwidth=bitwidth, k_blk=k_blk,
                              unroll=_unroll_for(k_blk)),
            out_shape=jax.ShapeDtypeStruct((k, r, _LANE), orig_dtype),
            grid=(k_tiles, r_tiles),
            in_specs=[pl.BlockSpec((k_blk, r_blk, _LANE), lambda kk, j: (kk, j, 0)),
                      pl.BlockSpec((r_blk, _LANE), lambda kk, j: (j, 0))],
            out_specs=pl.BlockSpec((k_blk, r_blk, _LANE), lambda kk, j: (kk, j, 0)),
            compiler_params=pltpu.CompilerParams(
                dimension_semantics=("parallel", "parallel"),
                vmem_limit_bytes=vmem_limit),
            cost_estimate=pl.CostEstimate(
                flops=6 * k * lp, transcendentals=0,
                bytes_accessed=2 * k * lp * itemsize + k_tiles * r * _LANE * 4),
        )(x3, lse)

    out = out3.reshape(k, lp)
    if lp != l:
        out = out[:, :l]
    return out.reshape(n, c, h, w)


def _reference(x, bitwidth):
    """Pure-numpy reference of the same forward semantics (for correctness checking)."""
    xnp = np.asarray(x, dtype=np.float32)
    n, c, h, w = xnp.shape
    k = n * c
    flat = xnp.reshape(k, h * w)
    fshift = 2.0 ** (bitwidth - 4)
    qmax_i = 2.0 ** (bitwidth - 1) - 1.0
    qmin_i = -(2.0 ** (bitwidth - 1))
    acc_max = qmax_i / fshift
    lse = np.full((h * w,), -8.0, dtype=np.float32)
    for i in range(k):
        t = flat[i]
        diff = np.abs(lse - t)
        d_int = np.minimum(np.floor(diff * 4096.0), 32767.0)
        lut = np.floor(np.log(1.0 + np.exp(-d_int / 4096.0)) * 65536.0).astype(np.float32) / 65536.0
        lse = np.maximum(lse, t) + lut
        lse = np.minimum(lse, np.float32(acc_max))
        lse = np.maximum(lse, np.float32(-8.0)).astype(np.float32)
    y = flat - lse[None, :]
    q = np.clip(np.round(y * fshift), qmin_i, qmax_i) / fshift
    return q.reshape(n, c, h, w).astype(np.float32)


if __name__ == "__main__":
    key = jax.random.PRNGKey(0)
    bitwidth = 8
    # NCHW, same convention as the PyTorch module.
    x = jax.random.normal(key, (2, 4, 16, 16), dtype=jnp.float32) * 2.0

    ref = _reference(x, bitwidth)
    fshift = 2.0 ** (bitwidth - 4)
    # Allow one output LSB (synthesized-table floor boundaries / polynomial-vs-libm ulps).
    tol = 1.0 / fshift + 1e-3

    # 1) Fused single-kernel path (whole N*C extent resident per spatial tile).
    y = jax.block_until_ready(quantized_log_softmax(x, quant_output=True, bitwidth=bitwidth))
    assert y.shape == x.shape and y.dtype == x.dtype
    grid_err = float(jnp.max(jnp.abs(y * fshift - jnp.round(y * fshift))))
    assert grid_err < 1e-4, f"output not on quantization grid: {grid_err}"
    assert bool(jnp.all(y * fshift <= 2 ** (bitwidth - 1) - 1 + 1e-4))
    assert bool(jnp.all(y * fshift >= -(2 ** (bitwidth - 1)) - 1e-4))
    max_diff = float(np.max(np.abs(ref - np.asarray(y, dtype=np.float32))))
    assert max_diff <= tol, f"fused path mismatch vs reference: {max_diff}"

    # 2) Split-k two-pass path, forced with a tiny N*C tile so the cross-block accumulation
    #    and the ragged-tail masking are exercised on this small shape.
    y2 = jax.block_until_ready(
        quantized_log_softmax(x, quant_output=True, bitwidth=bitwidth, k_block=3))
    max_diff2 = float(np.max(np.abs(ref - np.asarray(y2, dtype=np.float32))))
    assert max_diff2 <= tol, f"split path mismatch vs reference: {max_diff2}"

    print("KERNEL_OK")
</pallas_src>

<mosaic_0001>
module attributes {stable_mosaic.version = 11 : i64} {
  func.func @_fused_kernel(%arg0: i32, %arg1: memref<8x2x128xf32, #tpu.memory_space<vmem>>, %arg2: memref<8x2x128xf32, #tpu.memory_space<vmem>>) attributes {dimension_semantics = [#tpu.dimension_semantics<parallel>], iteration_bounds = array<i64: 1>, scalar_prefetch = 0 : i64, scratch_operands = 0 : i64, tpu.core_type = #tpu.core_type<tc>, window_params = [{transform_indices = @transform_0, window_bounds = array<i64: 8, 2, 128>}, {transform_indices = @transform_1, window_bounds = array<i64: 8, 2, 128>}]} {
    %cst = arith.constant -8.000000e+00 : f32
    %0 = vector.broadcast %cst : f32 to vector<2x128xf32>
    %c0_i32 = arith.constant 0 : i32
    %1 = arith.index_cast %c0_i32 : i32 to index
    %c0 = arith.constant 0 : index
    %c0_0 = arith.constant 0 : index
    %2 = vector.load %arg1[%1, %c0, %c0_0] : memref<8x2x128xf32, #tpu.memory_space<vmem>>, vector<1x2x128xf32>
    %3 = vector.shape_cast %2 : vector<1x2x128xf32> to vector<2x128xf32>
    %4 = arith.maximumf %0, %3 : vector<2x128xf32>
    %5 = arith.subf %0, %3 : vector<2x128xf32>
    %6 = math.absf %5 : vector<2x128xf32>
    %cst_1 = arith.constant 4.096000e+03 : f32
    %7 = vector.broadcast %cst_1 : f32 to vector<2x128xf32>
    %8 = arith.mulf %6, %7 : vector<2x128xf32>
    %9 = math.floor %8 : vector<2x128xf32>
    %cst_2 = arith.constant 3.276700e+04 : f32
    %10 = vector.broadcast %cst_2 : f32 to vector<2x128xf32>
    %11 = arith.minimumf %9, %10 : vector<2x128xf32>
    %cst_3 = arith.constant 2.44140625E-4 : f32
    %12 = vector.broadcast %cst_3 : f32 to vector<2x128xf32>
    %13 = arith.mulf %11, %12 : vector<2x128xf32>
    %cst_4 = arith.constant 1.250000e-01 : f32
    %14 = vector.broadcast %cst_4 : f32 to vector<2x128xf32>
    %15 = arith.mulf %13, %14 : vector<2x128xf32>
    %cst_5 = arith.constant 8.49453033E-4 : f32
    %16 = vector.broadcast %cst_5 : f32 to vector<2x128xf32>
    %17 = arith.mulf %16, %15 : vector<2x128xf32>
    %cst_6 = arith.constant -0.00765160844 : f32
    %18 = vector.broadcast %cst_6 : f32 to vector<2x128xf32>
    %19 = arith.addf %17, %18 : vector<2x128xf32>
    %20 = arith.mulf %19, %15 : vector<2x128xf32>
    %cst_7 = arith.constant 0.0412146635 : f32
    %21 = vector.broadcast %cst_7 : f32 to vector<2x128xf32>
    %22 = arith.addf %20, %21 : vector<2x128xf32>
    %23 = arith.mulf %22, %15 : vector<2x128xf32>
    %cst_8 = arith.constant -0.166506827 : f32
    %24 = vector.broadcast %cst_8 : f32 to vector<2x128xf32>
    %25 = arith.addf %23, %24 : vector<2x128xf32>
    %26 = arith.mulf %25, %15 : vector<2x128xf32>
    %cst_9 = arith.constant 0.499971777 : f32
    %27 = vector.broadcast %cst_9 : f32 to vector<2x128xf32>
    %28 = arith.addf %26, %27 : vector<2x128xf32>
    %29 = arith.mulf %28, %15 : vector<2x128xf32>
    %cst_10 = arith.constant -0.999997913 : f32
    %30 = vector.broadcast %cst_10 : f32 to vector<2x128xf32>
    %31 = arith.addf %29, %30 : vector<2x128xf32>
    %32 = arith.mulf %31, %15 : vector<2x128xf32>
    %cst_11 = arith.constant 0.99999994 : f32
    %33 = vector.broadcast %cst_11 : f32 to vector<2x128xf32>
    %34 = arith.addf %32, %33 : vector<2x128xf32>
    %35 = arith.mulf %34, %34 : vector<2x128xf32>
    %36 = arith.mulf %35, %35 : vector<2x128xf32>
    %37 = arith.mulf %36, %36 : vector<2x128xf32>
    %cst_12 = arith.constant -0.00846708752 : f32
    %38 = vector.broadcast %cst_12 : f32 to vector<2x128xf32>
    %39 = arith.mulf %38, %37 : vector<2x128xf32>
    %cst_13 = arith.constant 0.0436626226 : f32
    %40 = vector.broadcast %cst_13 : f32 to vector<2x128xf32>
    %41 = arith.addf %39, %40 : vector<2x128xf32>
    %42 = arith.mulf %41, %37 : vector<2x128xf32>
    %cst_14 = arith.constant -0.106805518 : f32
    %43 = vector.broadcast %cst_14 : f32 to vector<2x128xf32>
    %44 = arith.addf %42, %43 : vector<2x128xf32>
    %45 = arith.mulf %44, %37 : vector<2x128xf32>
    %cst_15 = arith.constant 0.176604345 : f32
    %46 = vector.broadcast %cst_15 : f32 to vector<2x128xf32>
    %47 = arith.addf %45, %46 : vector<2x128xf32>
    %48 = arith.mulf %47, %37 : vector<2x128xf32>
    %cst_16 = arith.constant -0.244536653 : f32
    %49 = vector.broadcast %cst_16 : f32 to vector<2x128xf32>
    %50 = arith.addf %48, %49 : vector<2x128xf32>
    %51 = arith.mulf %50, %37 : vector<2x128xf32>
    %cst_17 = arith.constant 0.332653254 : f32
    %52 = vector.broadcast %cst_17 : f32 to vector<2x128xf32>
    %53 = arith.addf %51, %52 : vector<2x128xf32>
    %54 = arith.mulf %53, %37 : vector<2x128xf32>
    %cst_18 = arith.constant -0.499963641 : f32
    %55 = vector.broadcast %cst_18 : f32 to vector<2x128xf32>
    %56 = arith.addf %54, %55 : vector<2x128xf32>
    %57 = arith.mulf %56, %37 : vector<2x128xf32>
    %cst_19 = arith.constant 0.999999523 : f32
    %58 = vector.broadcast %cst_19 : f32 to vector<2x128xf32>
    %59 = arith.addf %57, %58 : vector<2x128xf32>
    %60 = arith.mulf %37, %59 : vector<2x128xf32>
    %cst_20 = arith.constant 6.553600e+04 : f32
    %61 = vector.broadcast %cst_20 : f32 to vector<2x128xf32>
    %62 = arith.mulf %60, %61 : vector<2x128xf32>
    %63 = math.floor %62 : vector<2x128xf32>
    %cst_21 = arith.constant 1.52587891E-5 : f32
    %64 = vector.broadcast %cst_21 : f32 to vector<2x128xf32>
    %65 = arith.mulf %63, %64 : vector<2x128xf32>
    %66 = arith.addf %4, %65 : vector<2x128xf32>
    %cst_22 = arith.constant 7.937500e+00 : f32
    %67 = vector.broadcast %cst_22 : f32 to vector<2x128xf32>
    %68 = arith.minimumf %66, %67 : vector<2x128xf32>
    %cst_23 = arith.constant -8.000000e+00 : f32
    %69 = vector.broadcast %cst_23 : f32 to vector<2x128xf32>
    %70 = arith.maximumf %68, %69 : vector<2x128xf32>
    %c1_i32 = arith.constant 1 : i32
    %71 = arith.index_cast %c1_i32 : i32 to index
    %c0_24 = arith.constant 0 : index
    %c0_25 = arith.constant 0 : index
    %72 = vector.load %arg1[%71, %c0_24, %c0_25] : memref<8x2x128xf32, #tpu.memory_space<vmem>>, vector<1x2x128xf32>
    %73 = vector.shape_cast %72 : vector<1x2x128xf32> to vector<2x128xf32>
    %74 = arith.maximumf %70, %73 : vector<2x128xf32>
    %75 = arith.subf %70, %73 : vector<2x128xf32>
    %76 = math.absf %75 : vector<2x128xf32>
    %cst_26 = arith.constant 4.096000e+03 : f32
    %77 = vector.broadcast %cst_26 : f32 to vector<2x128xf32>
    %78 = arith.mulf %76, %77 : vector<2x128xf32>
    %79 = math.floor %78 : vector<2x128xf32>
    %cst_27 = arith.constant 3.276700e+04 : f32
    %80 = vector.broadcast %cst_27 : f32 to vector<2x128xf32>
    %81 = arith.minimumf %79, %80 : vector<2x128xf32>
    %cst_28 = arith.constant 2.44140625E-4 : f32
    %82 = vector.broadcast %cst_28 : f32 to vector<2x128xf32>
    %83 = arith.mulf %81, %82 : vector<2x128xf32>
    %cst_29 = arith.constant 1.250000e-01 : f32
    %84 = vector.broadcast %cst_29 : f32 to vector<2x128xf32>
    %85 = arith.mulf %83, %84 : vector<2x128xf32>
    %cst_30 = arith.constant 8.49453033E-4 : f32
    %86 = vector.broadcast %cst_30 : f32 to vector<2x128xf32>
    %87 = arith.mulf %86, %85 : vector<2x128xf32>
    %cst_31 = arith.constant -0.00765160844 : f32
    %88 = vector.broadcast %cst_31 : f32 to vector<2x128xf32>
    %89 = arith.addf %87, %88 : vector<2x128xf32>
    %90 = arith.mulf %89, %85 : vector<2x128xf32>
    %cst_32 = arith.constant 0.0412146635 : f32
    %91 = vector.broadcast %cst_32 : f32 to vector<2x128xf32>
    %92 = arith.addf %90, %91 : vector<2x128xf32>
    %93 = arith.mulf %92, %85 : vector<2x128xf32>
    %cst_33 = arith.constant -0.166506827 : f32
    %94 = vector.broadcast %cst_33 : f32 to vector<2x128xf32>
    %95 = arith.addf %93, %94 : vector<2x128xf32>
    %96 = arith.mulf %95, %85 : vector<2x128xf32>
    %cst_34 = arith.constant 0.499971777 : f32
    %97 = vector.broadcast %cst_34 : f32 to vector<2x128xf32>
    %98 = arith.addf %96, %97 : vector<2x128xf32>
    %99 = arith.mulf %98, %85 : vector<2x128xf32>
    %cst_35 = arith.constant -0.999997913 : f32
    %100 = vector.broadcast %cst_35 : f32 to vector<2x128xf32>
    %101 = arith.addf %99, %100 : vector<2x128xf32>
    %102 = arith.mulf %101, %85 : vector<2x128xf32>
    %cst_36 = arith.constant 0.99999994 : f32
    %103 = vector.broadcast %cst_36 : f32 to vector<2x128xf32>
    %104 = arith.addf %102, %103 : vector<2x128xf32>
    %105 = arith.mulf %104, %104 : vector<2x128xf32>
    %106 = arith.mulf %105, %105 : vector<2x128xf32>
    %107 = arith.mulf %106, %106 : vector<2x128xf32>
    %cst_37 = arith.constant -0.00846708752 : f32
    %108 = vector.broadcast %cst_37 : f32 to vector<2x128xf32>
    %109 = arith.mulf %108, %107 : vector<2x128xf32>
    %cst_38 = arith.constant 0.0436626226 : f32
    %110 = vector.broadcast %cst_38 : f32 to vector<2x128xf32>
    %111 = arith.addf %109, %110 : vector<2x128xf32>
    %112 = arith.mulf %111, %107 : vector<2x128xf32>
    %cst_39 = arith.constant -0.106805518 : f32
    %113 = vector.broadcast %cst_39 : f32 to vector<2x128xf32>
    %114 = arith.addf %112, %113 : vector<2x128xf32>
    %115 = arith.mulf %114, %107 : vector<2x128xf32>
    %cst_40 = arith.constant 0.176604345 : f32
    %116 = vector.broadcast %cst_40 : f32 to vector<2x128xf32>
    %117 = arith.addf %115, %116 : vector<2x128xf32>
    %118 = arith.mulf %117, %107 : vector<2x128xf32>
    %cst_41 = arith.constant -0.244536653 : f32
    %119 = vector.broadcast %cst_41 : f32 to vector<2x128xf32>
    %120 = arith.addf %118, %119 : vector<2x128xf32>
    %121 = arith.mulf %120, %107 : vector<2x128xf32>
    %cst_42 = arith.constant 0.332653254 : f32
    %122 = vector.broadcast %cst_42 : f32 to vector<2x128xf32>
    %123 = arith.addf %121, %122 : vector<2x128xf32>
    %124 = arith.mulf %123, %107 : vector<2x128xf32>
    %cst_43 = arith.constant -0.499963641 : f32
    %125 = vector.broadcast %cst_43 : f32 to vector<2x128xf32>
    %126 = arith.addf %124, %125 : vector<2x128xf32>
    %127 = arith.mulf %126, %107 : vector<2x128xf32>
    %cst_44 = arith.constant 0.999999523 : f32
    %128 = vector.broadcast %cst_44 : f32 to vector<2x128xf32>
    %129 = arith.addf %127, %128 : vector<2x128xf32>
    %130 = arith.mulf %107, %129 : vector<2x128xf32>
    %cst_45 = arith.constant 6.553600e+04 : f32
    %131 = vector.broadcast %cst_45 : f32 to vector<2x128xf32>
    %132 = arith.mulf %130, %131 : vector<2x128xf32>
    %133 = math.floor %132 : vector<2x128xf32>
    %cst_46 = arith.constant 1.52587891E-5 : f32
    %134 = vector.broadcast %cst_46 : f32 to vector<2x128xf32>
    %135 = arith.mulf %133, %134 : vector<2x128xf32>
    %136 = arith.addf %74, %135 : vector<2x128xf32>
    %cst_47 = arith.constant 7.937500e+00 : f32
    %137 = vector.broadcast %cst_47 : f32 to vector<2x128xf32>
    %138 = arith.minimumf %136, %137 : vector<2x128xf32>
    %cst_48 = arith.constant -8.000000e+00 : f32
    %139 = vector.broadcast %cst_48 : f32 to vector<2x128xf32>
    %140 = arith.maximumf %138, %139 : vector<2x128xf32>
    %c2_i32 = arith.constant 2 : i32
    %141 = arith.index_cast %c2_i32 : i32 to index
    %c0_49 = arith.constant 0 : index
    %c0_50 = arith.constant 0 : index
    %142 = vector.load %arg1[%141, %c0_49, %c0_50] : memref<8x2x128xf32, #tpu.memory_space<vmem>>, vector<1x2x128xf32>
    %143 = vector.shape_cast %142 : vector<1x2x128xf32> to vector<2x128xf32>
    %144 = arith.maximumf %140, %143 : vector<2x128xf32>
    %145 = arith.subf %140, %143 : vector<2x128xf32>
    %146 = math.absf %145 : vector<2x128xf32>
    %cst_51 = arith.constant 4.096000e+03 : f32
    %147 = vector.broadcast %cst_51 : f32 to vector<2x128xf32>
    %148 = arith.mulf %146, %147 : vector<2x128xf32>
    %149 = math.floor %148 : vector<2x128xf32>
    %cst_52 = arith.constant 3.276700e+04 : f32
    %150 = vector.broadcast %cst_52 : f32 to vector<2x128xf32>
    %151 = arith.minimumf %149, %150 : vector<2x128xf32>
    %cst_53 = arith.constant 2.44140625E-4 : f32
    %152 = vector.broadcast %cst_53 : f32 to vector<2x128xf32>
    %153 = arith.mulf %151, %152 : vector<2x128xf32>
    %cst_54 = arith.constant 1.250000e-01 : f32
    %154 = vector.broadcast %cst_54 : f32 to vector<2x128xf32>
    %155 = arith.mulf %153, %154 : vector<2x128xf32>
    %cst_55 = arith.constant 8.49453033E-4 : f32
    %156 = vector.broadcast %cst_55 : f32 to vector<2x128xf32>
    %157 = arith.mulf %156, %155 : vector<2x128xf32>
    %cst_56 = arith.constant -0.00765160844 : f32
    %158 = vector.broadcast %cst_56 : f32 to vector<2x128xf32>
    %159 = arith.addf %157, %158 : vector<2x128xf32>
    %160 = arith.mulf %159, %155 : vector<2x128xf32>
    %cst_57 = arith.constant 0.0412146635 : f32
    %161 = vector.broadcast %cst_57 : f32 to vector<2x128xf32>
    %162 = arith.addf %160, %161 : vector<2x128xf32>
    %163 = arith.mulf %162, %155 : vector<2x128xf32>
    %cst_58 = arith.constant -0.166506827 : f32
    %164 = vector.broadcast %cst_58 : f32 to vector<2x128xf32>
    %165 = arith.addf %163, %164 : vector<2x128xf32>
    %166 = arith.mulf %165, %155 : vector<2x128xf32>
    %cst_59 = arith.constant 0.499971777 : f32
    %167 = vector.broadcast %cst_59 : f32 to vector<2x128xf32>
    %168 = arith.addf %166, %167 : vector<2x128xf32>
    %169 = arith.mulf %168, %155 : vector<2x128xf32>
    %cst_60 = arith.constant -0.999997913 : f32
    %170 = vector.broadcast %cst_60 : f32 to vector<2x128xf32>
    %171 = arith.addf %169, %170 : vector<2x128xf32>
    %172 = arith.mulf %171, %155 : vector<2x128xf32>
    %cst_61 = arith.constant 0.99999994 : f32
    %173 = vector.broadcast %cst_61 : f32 to vector<2x128xf32>
    %174 = arith.addf %172, %173 : vector<2x128xf32>
    %175 = arith.mulf %174, %174 : vector<2x128xf32>
    %176 = arith.mulf %175, %175 : vector<2x128xf32>
    %177 = arith.mulf %176, %176 : vector<2x128xf32>
    %cst_62 = arith.constant -0.00846708752 : f32
    %178 = vector.broadcast %cst_62 : f32 to vector<2x128xf32>
    %179 = arith.mulf %178, %177 : vector<2x128xf32>
    %cst_63 = arith.constant 0.0436626226 : f32
    %180 = vector.broadcast %cst_63 : f32 to vector<2x128xf32>
    %181 = arith.addf %179, %180 : vector<2x128xf32>
    %182 = arith.mulf %181, %177 : vector<2x128xf32>
    %cst_64 = arith.constant -0.106805518 : f32
    %183 = vector.broadcast %cst_64 : f32 to vector<2x128xf32>
    %184 = arith.addf %182, %183 : vector<2x128xf32>
    %185 = arith.mulf %184, %177 : vector<2x128xf32>
    %cst_65 = arith.constant 0.176604345 : f32
    %186 = vector.broadcast %cst_65 : f32 to vector<2x128xf32>
    %187 = arith.addf %185, %186 : vector<2x128xf32>
    %188 = arith.mulf %187, %177 : vector<2x128xf32>
    %cst_66 = arith.constant -0.244536653 : f32
    %189 = vector.broadcast %cst_66 : f32 to vector<2x128xf32>
    %190 = arith.addf %188, %189 : vector<2x128xf32>
    %191 = arith.mulf %190, %177 : vector<2x128xf32>
    %cst_67 = arith.constant 0.332653254 : f32
    %192 = vector.broadcast %cst_67 : f32 to vector<2x128xf32>
    %193 = arith.addf %191, %192 : vector<2x128xf32>
    %194 = arith.mulf %193, %177 : vector<2x128xf32>
    %cst_68 = arith.constant -0.499963641 : f32
    %195 = vector.broadcast %cst_68 : f32 to vector<2x128xf32>
    %196 = arith.addf %194, %195 : vector<2x128xf32>
    %197 = arith.mulf %196, %177 : vector<2x128xf32>
    %cst_69 = arith.constant 0.999999523 : f32
    %198 = vector.broadcast %cst_69 : f32 to vector<2x128xf32>
    %199 = arith.addf %197, %198 : vector<2x128xf32>
    %200 = arith.mulf %177, %199 : vector<2x128xf32>
    %cst_70 = arith.constant 6.553600e+04 : f32
    %201 = vector.broadcast %cst_70 : f32 to vector<2x128xf32>
    %202 = arith.mulf %200, %201 : vector<2x128xf32>
    %203 = math.floor %202 : vector<2x128xf32>
    %cst_71 = arith.constant 1.52587891E-5 : f32
    %204 = vector.broadcast %cst_71 : f32 to vector<2x128xf32>
    %205 = arith.mulf %203, %204 : vector<2x128xf32>
    %206 = arith.addf %144, %205 : vector<2x128xf32>
    %cst_72 = arith.constant 7.937500e+00 : f32
    %207 = vector.broadcast %cst_72 : f32 to vector<2x128xf32>
    %208 = arith.minimumf %206, %207 : vector<2x128xf32>
    %cst_73 = arith.constant -8.000000e+00 : f32
    %209 = vector.broadcast %cst_73 : f32 to vector<2x128xf32>
    %210 = arith.maximumf %208, %209 : vector<2x128xf32>
    %c3_i32 = arith.constant 3 : i32
    %211 = arith.index_cast %c3_i32 : i32 to index
    %c0_74 = arith.constant 0 : index
    %c0_75 = arith.constant 0 : index
    %212 = vector.load %arg1[%211, %c0_74, %c0_75] : memref<8x2x128xf32, #tpu.memory_space<vmem>>, vector<1x2x128xf32>
    %213 = vector.shape_cast %212 : vector<1x2x128xf32> to vector<2x128xf32>
    %214 = arith.maximumf %210, %213 : vector<2x128xf32>
    %215 = arith.subf %210, %213 : vector<2x128xf32>
    %216 = math.absf %215 : vector<2x128xf32>
    %cst_76 = arith.constant 4.096000e+03 : f32
    %217 = vector.broadcast %cst_76 : f32 to vector<2x128xf32>
    %218 = arith.mulf %216, %217 : vector<2x128xf32>
    %219 = math.floor %218 : vector<2x128xf32>
    %cst_77 = arith.constant 3.276700e+04 : f32
    %220 = vector.broadcast %cst_77 : f32 to vector<2x128xf32>
    %221 = arith.minimumf %219, %220 : vector<2x128xf32>
    %cst_78 = arith.constant 2.44140625E-4 : f32
    %222 = vector.broadcast %cst_78 : f32 to vector<2x128xf32>
    %223 = arith.mulf %221, %222 : vector<2x128xf32>
    %cst_79 = arith.constant 1.250000e-01 : f32
    %224 = vector.broadcast %cst_79 : f32 to vector<2x128xf32>
    %225 = arith.mulf %223, %224 : vector<2x128xf32>
    %cst_80 = arith.constant 8.49453033E-4 : f32
    %226 = vector.broadcast %cst_80 : f32 to vector<2x128xf32>
    %227 = arith.mulf %226, %225 : vector<2x128xf32>
    %cst_81 = arith.constant -0.00765160844 : f32
    %228 = vector.broadcast %cst_81 : f32 to vector<2x128xf32>
    %229 = arith.addf %227, %228 : vector<2x128xf32>
    %230 = arith.mulf %229, %225 : vector<2x128xf32>
    %cst_82 = arith.constant 0.0412146635 : f32
    %231 = vector.broadcast %cst_82 : f32 to vector<2x128xf32>
    %232 = arith.addf %230, %231 : vector<2x128xf32>
    %233 = arith.mulf %232, %225 : vector<2x128xf32>
    %cst_83 = arith.constant -0.166506827 : f32
    %234 = vector.broadcast %cst_83 : f32 to vector<2x128xf32>
    %235 = arith.addf %233, %234 : vector<2x128xf32>
    %236 = arith.mulf %235, %225 : vector<2x128xf32>
    %cst_84 = arith.constant 0.499971777 : f32
    %237 = vector.broadcast %cst_84 : f32 to vector<2x128xf32>
    %238 = arith.addf %236, %237 : vector<2x128xf32>
    %239 = arith.mulf %238, %225 : vector<2x128xf32>
    %cst_85 = arith.constant -0.999997913 : f32
    %240 = vector.broadcast %cst_85 : f32 to vector<2x128xf32>
    %241 = arith.addf %239, %240 : vector<2x128xf32>
    %242 = arith.mulf %241, %225 : vector<2x128xf32>
    %cst_86 = arith.constant 0.99999994 : f32
    %243 = vector.broadcast %cst_86 : f32 to vector<2x128xf32>
    %244 = arith.addf %242, %243 : vector<2x128xf32>
    %245 = arith.mulf %244, %244 : vector<2x128xf32>
    %246 = arith.mulf %245, %245 : vector<2x128xf32>
    %247 = arith.mulf %246, %246 : vector<2x128xf32>
    %cst_87 = arith.constant -0.00846708752 : f32
    %248 = vector.broadcast %cst_87 : f32 to vector<2x128xf32>
    %249 = arith.mulf %248, %247 : vector<2x128xf32>
    %cst_88 = arith.constant 0.0436626226 : f32
    %250 = vector.broadcast %cst_88 : f32 to vector<2x128xf32>
    %251 = arith.addf %249, %250 : vector<2x128xf32>
    %252 = arith.mulf %251, %247 : vector<2x128xf32>
    %cst_89 = arith.constant -0.106805518 : f32
    %253 = vector.broadcast %cst_89 : f32 to vector<2x128xf32>
    %254 = arith.addf %252, %253 : vector<2x128xf32>
    %255 = arith.mulf %254, %247 : vector<2x128xf32>
    %cst_90 = arith.constant 0.176604345 : f32
    %256 = vector.broadcast %cst_90 : f32 to vector<2x128xf32>
    %257 = arith.addf %255, %256 : vector<2x128xf32>
    %258 = arith.mulf %257, %247 : vector<2x128xf32>
    %cst_91 = arith.constant -0.244536653 : f32
    %259 = vector.broadcast %cst_91 : f32 to vector<2x128xf32>
    %260 = arith.addf %258, %259 : vector<2x128xf32>
    %261 = arith.mulf %260, %247 : vector<2x128xf32>
    %cst_92 = arith.constant 0.332653254 : f32
    %262 = vector.broadcast %cst_92 : f32 to vector<2x128xf32>
    %263 = arith.addf %261, %262 : vector<2x128xf32>
    %264 = arith.mulf %263, %247 : vector<2x128xf32>
    %cst_93 = arith.constant -0.499963641 : f32
    %265 = vector.broadcast %cst_93 : f32 to vector<2x128xf32>
    %266 = arith.addf %264, %265 : vector<2x128xf32>
    %267 = arith.mulf %266, %247 : vector<2x128xf32>
    %cst_94 = arith.constant 0.999999523 : f32
    %268 = vector.broadcast %cst_94 : f32 to vector<2x128xf32>
    %269 = arith.addf %267, %268 : vector<2x128xf32>
    %270 = arith.mulf %247, %269 : vector<2x128xf32>
    %cst_95 = arith.constant 6.553600e+04 : f32
    %271 = vector.broadcast %cst_95 : f32 to vector<2x128xf32>
    %272 = arith.mulf %270, %271 : vector<2x128xf32>
    %273 = math.floor %272 : vector<2x128xf32>
    %cst_96 = arith.constant 1.52587891E-5 : f32
    %274 = vector.broadcast %cst_96 : f32 to vector<2x128xf32>
    %275 = arith.mulf %273, %274 : vector<2x128xf32>
    %276 = arith.addf %214, %275 : vector<2x128xf32>
    %cst_97 = arith.constant 7.937500e+00 : f32
    %277 = vector.broadcast %cst_97 : f32 to vector<2x128xf32>
    %278 = arith.minimumf %276, %277 : vector<2x128xf32>
    %cst_98 = arith.constant -8.000000e+00 : f32
    %279 = vector.broadcast %cst_98 : f32 to vector<2x128xf32>
    %280 = arith.maximumf %278, %279 : vector<2x128xf32>
    %c4_i32 = arith.constant 4 : i32
    %281 = arith.index_cast %c4_i32 : i32 to index
    %c0_99 = arith.constant 0 : index
    %c0_100 = arith.constant 0 : index
    %282 = vector.load %arg1[%281, %c0_99, %c0_100] : memref<8x2x128xf32, #tpu.memory_space<vmem>>, vector<1x2x128xf32>
    %283 = vector.shape_cast %282 : vector<1x2x128xf32> to vector<2x128xf32>
    %284 = arith.maximumf %280, %283 : vector<2x128xf32>
    %285 = arith.subf %280, %283 : vector<2x128xf32>
    %286 = math.absf %285 : vector<2x128xf32>
    %cst_101 = arith.constant 4.096000e+03 : f32
    %287 = vector.broadcast %cst_101 : f32 to vector<2x128xf32>
    %288 = arith.mulf %286, %287 : vector<2x128xf32>
    %289 = math.floor %288 : vector<2x128xf32>
    %cst_102 = arith.constant 3.276700e+04 : f32
    %290 = vector.broadcast %cst_102 : f32 to vector<2x128xf32>
    %291 = arith.minimumf %289, %290 : vector<2x128xf32>
    %cst_103 = arith.constant 2.44140625E-4 : f32
    %292 = vector.broadcast %cst_103 : f32 to vector<2x128xf32>
    %293 = arith.mulf %291, %292 : vector<2x128xf32>
    %cst_104 = arith.constant 1.250000e-01 : f32
    %294 = vector.broadcast %cst_104 : f32 to vector<2x128xf32>
    %295 = arith.mulf %293, %294 : vector<2x128xf32>
    %cst_105 = arith.constant 8.49453033E-4 : f32
    %296 = vector.broadcast %cst_105 : f32 to vector<2x128xf32>
    %297 = arith.mulf %296, %295 : vector<2x128xf32>
    %cst_106 = arith.constant -0.00765160844 : f32
    %298 = vector.broadcast %cst_106 : f32 to vector<2x128xf32>
    %299 = arith.addf %297, %298 : vector<2x128xf32>
    %300 = arith.mulf %299, %295 : vector<2x128xf32>
    %cst_107 = arith.constant 0.0412146635 : f32
    %301 = vector.broadcast %cst_107 : f32 to vector<2x128xf32>
    %302 = arith.addf %300, %301 : vector<2x128xf32>
    %303 = arith.mulf %302, %295 : vector<2x128xf32>
    %cst_108 = arith.constant -0.166506827 : f32
    %304 = vector.broadcast %cst_108 : f32 to vector<2x128xf32>
    %305 = arith.addf %303, %304 : vector<2x128xf32>
    %306 = arith.mulf %305, %295 : vector<2x128xf32>
    %cst_109 = arith.constant 0.499971777 : f32
    %307 = vector.broadcast %cst_109 : f32 to vector<2x128xf32>
    %308 = arith.addf %306, %307 : vector<2x128xf32>
    %309 = arith.mulf %308, %295 : vector<2x128xf32>
    %cst_110 = arith.constant -0.999997913 : f32
    %310 = vector.broadcast %cst_110 : f32 to vector<2x128xf32>
    %311 = arith.addf %309, %310 : vector<2x128xf32>
    %312 = arith.mulf %311, %295 : vector<2x128xf32>
    %cst_111 = arith.constant 0.99999994 : f32
    %313 = vector.broadcast %cst_111 : f32 to vector<2x128xf32>
    %314 = arith.addf %312, %313 : vector<2x128xf32>
    %315 = arith.mulf %314, %314 : vector<2x128xf32>
    %316 = arith.mulf %315, %315 : vector<2x128xf32>
    %317 = arith.mulf %316, %316 : vector<2x128xf32>
    %cst_112 = arith.constant -0.00846708752 : f32
    %318 = vector.broadcast %cst_112 : f32 to vector<2x128xf32>
    %319 = arith.mulf %318, %317 : vector<2x128xf32>
    %cst_113 = arith.constant 0.0436626226 : f32
    %320 = vector.broadcast %cst_113 : f32 to vector<2x128xf32>
    %321 = arith.addf %319, %320 : vector<2x128xf32>
    %322 = arith.mulf %321, %317 : vector<2x128xf32>
    %cst_114 = arith.constant -0.106805518 : f32
    %323 = vector.broadcast %cst_114 : f32 to vector<2x128xf32>
    %324 = arith.addf %322, %323 : vector<2x128xf32>
    %325 = arith.mulf %324, %317 : vector<2x128xf32>
    %cst_115 = arith.constant 0.176604345 : f32
    %326 = vector.broadcast %cst_115 : f32 to vector<2x128xf32>
    %327 = arith.addf %325, %326 : vector<2x128xf32>
    %328 = arith.mulf %327, %317 : vector<2x128xf32>
    %cst_116 = arith.constant -0.244536653 : f32
    %329 = vector.broadcast %cst_116 : f32 to vector<2x128xf32>
    %330 = arith.addf %328, %329 : vector<2x128xf32>
    %331 = arith.mulf %330, %317 : vector<2x128xf32>
    %cst_117 = arith.constant 0.332653254 : f32
    %332 = vector.broadcast %cst_117 : f32 to vector<2x128xf32>
    %333 = arith.addf %331, %332 : vector<2x128xf32>
    %334 = arith.mulf %333, %317 : vector<2x128xf32>
    %cst_118 = arith.constant -0.499963641 : f32
    %335 = vector.broadcast %cst_118 : f32 to vector<2x128xf32>
    %336 = arith.addf %334, %335 : vector<2x128xf32>
    %337 = arith.mulf %336, %317 : vector<2x128xf32>
    %cst_119 = arith.constant 0.999999523 : f32
    %338 = vector.broadcast %cst_119 : f32 to vector<2x128xf32>
    %339 = arith.addf %337, %338 : vector<2x128xf32>
    %340 = arith.mulf %317, %339 : vector<2x128xf32>
    %cst_120 = arith.constant 6.553600e+04 : f32
    %341 = vector.broadcast %cst_120 : f32 to vector<2x128xf32>
    %342 = arith.mulf %340, %341 : vector<2x128xf32>
    %343 = math.floor %342 : vector<2x128xf32>
    %cst_121 = arith.constant 1.52587891E-5 : f32
    %344 = vector.broadcast %cst_121 : f32 to vector<2x128xf32>
    %345 = arith.mulf %343, %344 : vector<2x128xf32>
    %346 = arith.addf %284, %345 : vector<2x128xf32>
    %cst_122 = arith.constant 7.937500e+00 : f32
    %347 = vector.broadcast %cst_122 : f32 to vector<2x128xf32>
    %348 = arith.minimumf %346, %347 : vector<2x128xf32>
    %cst_123 = arith.constant -8.000000e+00 : f32
    %349 = vector.broadcast %cst_123 : f32 to vector<2x128xf32>
    %350 = arith.maximumf %348, %349 : vector<2x128xf32>
    %c5_i32 = arith.constant 5 : i32
    %351 = arith.index_cast %c5_i32 : i32 to index
    %c0_124 = arith.constant 0 : index
    %c0_125 = arith.constant 0 : index
    %352 = vector.load %arg1[%351, %c0_124, %c0_125] : memref<8x2x128xf32, #tpu.memory_space<vmem>>, vector<1x2x128xf32>
    %353 = vector.shape_cast %352 : vector<1x2x128xf32> to vector<2x128xf32>
    %354 = arith.maximumf %350, %353 : vector<2x128xf32>
    %355 = arith.subf %350, %353 : vector<2x128xf32>
    %356 = math.absf %355 : vector<2x128xf32>
    %cst_126 = arith.constant 4.096000e+03 : f32
    %357 = vector.broadcast %cst_126 : f32 to vector<2x128xf32>
    %358 = arith.mulf %356, %357 : vector<2x128xf32>
    %359 = math.floor %358 : vector<2x128xf32>
    %cst_127 = arith.constant 3.276700e+04 : f32
    %360 = vector.broadcast %cst_127 : f32 to vector<2x128xf32>
    %361 = arith.minimumf %359, %360 : vector<2x128xf32>
    %cst_128 = arith.constant 2.44140625E-4 : f32
    %362 = vector.broadcast %cst_128 : f32 to vector<2x128xf32>
    %363 = arith.mulf %361, %362 : vector<2x128xf32>
    %cst_129 = arith.constant 1.250000e-01 : f32
    %364 = vector.broadcast %cst_129 : f32 to vector<2x128xf32>
    %365 = arith.mulf %363, %364 : vector<2x128xf32>
    %cst_130 = arith.constant 8.49453033E-4 : f32
    %366 = vector.broadcast %cst_130 : f32 to vector<2x128xf32>
    %367 = arith.mulf %366, %365 : vector<2x128xf32>
    %cst_131 = arith.constant -0.00765160844 : f32
    %368 = vector.broadcast %cst_131 : f32 to vector<2x128xf32>
    %369 = arith.addf %367, %368 : vector<2x128xf32>
    %370 = arith.mulf %369, %365 : vector<2x128xf32>
    %cst_132 = arith.constant 0.0412146635 : f32
    %371 = vector.broadcast %cst_132 : f32 to vector<2x128xf32>
    %372 = arith.addf %370, %371 : vector<2x128xf32>
    %373 = arith.mulf %372, %365 : vector<2x128xf32>
    %cst_133 = arith.constant -0.166506827 : f32
    %374 = vector.broadcast %cst_133 : f32 to vector<2x128xf32>
    %375 = arith.addf %373, %374 : vector<2x128xf32>
    %376 = arith.mulf %375, %365 : vector<2x128xf32>
    %cst_134 = arith.constant 0.499971777 : f32
    %377 = vector.broadcast %cst_134 : f32 to vector<2x128xf32>
    %378 = arith.addf %376, %377 : vector<2x128xf32>
    %379 = arith.mulf %378, %365 : vector<2x128xf32>
    %cst_135 = arith.constant -0.999997913 : f32
    %380 = vector.broadcast %cst_135 : f32 to vector<2x128xf32>
    %381 = arith.addf %379, %380 : vector<2x128xf32>
    %382 = arith.mulf %381, %365 : vector<2x128xf32>
    %cst_136 = arith.constant 0.99999994 : f32
    %383 = vector.broadcast %cst_136 : f32 to vector<2x128xf32>
    %384 = arith.addf %382, %383 : vector<2x128xf32>
    %385 = arith.mulf %384, %384 : vector<2x128xf32>
    %386 = arith.mulf %385, %385 : vector<2x128xf32>
    %387 = arith.mulf %386, %386 : vector<2x128xf32>
    %cst_137 = arith.constant -0.00846708752 : f32
    %388 = vector.broadcast %cst_137 : f32 to vector<2x128xf32>
    %389 = arith.mulf %388, %387 : vector<2x128xf32>
    %cst_138 = arith.constant 0.0436626226 : f32
    %390 = vector.broadcast %cst_138 : f32 to vector<2x128xf32>
    %391 = arith.addf %389, %390 : vector<2x128xf32>
    %392 = arith.mulf %391, %387 : vector<2x128xf32>
    %cst_139 = arith.constant -0.106805518 : f32
    %393 = vector.broadcast %cst_139 : f32 to vector<2x128xf32>
    %394 = arith.addf %392, %393 : vector<2x128xf32>
    %395 = arith.mulf %394, %387 : vector<2x128xf32>
    %cst_140 = arith.constant 0.176604345 : f32
    %396 = vector.broadcast %cst_140 : f32 to vector<2x128xf32>
    %397 = arith.addf %395, %396 : vector<2x128xf32>
    %398 = arith.mulf %397, %387 : vector<2x128xf32>
    %cst_141 = arith.constant -0.244536653 : f32
    %399 = vector.broadcast %cst_141 : f32 to vector<2x128xf32>
    %400 = arith.addf %398, %399 : vector<2x128xf32>
    %401 = arith.mulf %400, %387 : vector<2x128xf32>
    %cst_142 = arith.constant 0.332653254 : f32
    %402 = vector.broadcast %cst_142 : f32 to vector<2x128xf32>
    %403 = arith.addf %401, %402 : vector<2x128xf32>
    %404 = arith.mulf %403, %387 : vector<2x128xf32>
    %cst_143 = arith.constant -0.499963641 : f32
    %405 = vector.broadcast %cst_143 : f32 to vector<2x128xf32>
    %406 = arith.addf %404, %405 : vector<2x128xf32>
    %407 = arith.mulf %406, %387 : vector<2x128xf32>
    %cst_144 = arith.constant 0.999999523 : f32
    %408 = vector.broadcast %cst_144 : f32 to vector<2x128xf32>
    %409 = arith.addf %407, %408 : vector<2x128xf32>
    %410 = arith.mulf %387, %409 : vector<2x128xf32>
    %cst_145 = arith.constant 6.553600e+04 : f32
    %411 = vector.broadcast %cst_145 : f32 to vector<2x128xf32>
    %412 = arith.mulf %410, %411 : vector<2x128xf32>
    %413 = math.floor %412 : vector<2x128xf32>
    %cst_146 = arith.constant 1.52587891E-5 : f32
    %414 = vector.broadcast %cst_146 : f32 to vector<2x128xf32>
    %415 = arith.mulf %413, %414 : vector<2x128xf32>
    %416 = arith.addf %354, %415 : vector<2x128xf32>
    %cst_147 = arith.constant 7.937500e+00 : f32
    %417 = vector.broadcast %cst_147 : f32 to vector<2x128xf32>
    %418 = arith.minimumf %416, %417 : vector<2x128xf32>
    %cst_148 = arith.constant -8.000000e+00 : f32
    %419 = vector.broadcast %cst_148 : f32 to vector<2x128xf32>
    %420 = arith.maximumf %418, %419 : vector<2x128xf32>
    %c6_i32 = arith.constant 6 : i32
    %421 = arith.index_cast %c6_i32 : i32 to index
    %c0_149 = arith.constant 0 : index
    %c0_150 = arith.constant 0 : index
    %422 = vector.load %arg1[%421, %c0_149, %c0_150] : memref<8x2x128xf32, #tpu.memory_space<vmem>>, vector<1x2x128xf32>
    %423 = vector.shape_cast %422 : vector<1x2x128xf32> to vector<2x128xf32>
    %424 = arith.maximumf %420, %423 : vector<2x128xf32>
    %425 = arith.subf %420, %423 : vector<2x128xf32>
    %426 = math.absf %425 : vector<2x128xf32>
    %cst_151 = arith.constant 4.096000e+03 : f32
    %427 = vector.broadcast %cst_151 : f32 to vector<2x128xf32>
    %428 = arith.mulf %426, %427 : vector<2x128xf32>
    %429 = math.floor %428 : vector<2x128xf32>
    %cst_152 = arith.constant 3.276700e+04 : f32
    %430 = vector.broadcast %cst_152 : f32 to vector<2x128xf32>
    %431 = arith.minimumf %429, %430 : vector<2x128xf32>
    %cst_153 = arith.constant 2.44140625E-4 : f32
    %432 = vector.broadcast %cst_153 : f32 to vector<2x128xf32>
    %433 = arith.mulf %431, %432 : vector<2x128xf32>
    %cst_154 = arith.constant 1.250000e-01 : f32
    %434 = vector.broadcast %cst_154 : f32 to vector<2x128xf32>
    %435 = arith.mulf %433, %434 : vector<2x128xf32>
    %cst_155 = arith.constant 8.49453033E-4 : f32
    %436 = vector.broadcast %cst_155 : f32 to vector<2x128xf32>
    %437 = arith.mulf %436, %435 : vector<2x128xf32>
    %cst_156 = arith.constant -0.00765160844 : f32
    %438 = vector.broadcast %cst_156 : f32 to vector<2x128xf32>
    %439 = arith.addf %437, %438 : vector<2x128xf32>
    %440 = arith.mulf %439, %435 : vector<2x128xf32>
    %cst_157 = arith.constant 0.0412146635 : f32
    %441 = vector.broadcast %cst_157 : f32 to vector<2x128xf32>
    %442 = arith.addf %440, %441 : vector<2x128xf32>
    %443 = arith.mulf %442, %435 : vector<2x128xf32>
    %cst_158 = arith.constant -0.166506827 : f32
    %444 = vector.broadcast %cst_158 : f32 to vector<2x128xf32>
    %445 = arith.addf %443, %444 : vector<2x128xf32>
    %446 = arith.mulf %445, %435 : vector<2x128xf32>
    %cst_159 = arith.constant 0.499971777 : f32
    %447 = vector.broadcast %cst_159 : f32 to vector<2x128xf32>
    %448 = arith.addf %446, %447 : vector<2x128xf32>
    %449 = arith.mulf %448, %435 : vector<2x128xf32>
    %cst_160 = arith.constant -0.999997913 : f32
    %450 = vector.broadcast %cst_160 : f32 to vector<2x128xf32>
    %451 = arith.addf %449, %450 : vector<2x128xf32>
    %452 = arith.mulf %451, %435 : vector<2x128xf32>
    %cst_161 = arith.constant 0.99999994 : f32
    %453 = vector.broadcast %cst_161 : f32 to vector<2x128xf32>
    %454 = arith.addf %452, %453 : vector<2x128xf32>
    %455 = arith.mulf %454, %454 : vector<2x128xf32>
    %456 = arith.mulf %455, %455 : vector<2x128xf32>
    %457 = arith.mulf %456, %456 : vector<2x128xf32>
    %cst_162 = arith.constant -0.00846708752 : f32
    %458 = vector.broadcast %cst_162 : f32 to vector<2x128xf32>
    %459 = arith.mulf %458, %457 : vector<2x128xf32>
    %cst_163 = arith.constant 0.0436626226 : f32
    %460 = vector.broadcast %cst_163 : f32 to vector<2x128xf32>
    %461 = arith.addf %459, %460 : vector<2x128xf32>
    %462 = arith.mulf %461, %457 : vector<2x128xf32>
    %cst_164 = arith.constant -0.106805518 : f32
    %463 = vector.broadcast %cst_164 : f32 to vector<2x128xf32>
    %464 = arith.addf %462, %463 : vector<2x128xf32>
    %465 = arith.mulf %464, %457 : vector<2x128xf32>
    %cst_165 = arith.constant 0.176604345 : f32
    %466 = vector.broadcast %cst_165 : f32 to vector<2x128xf32>
    %467 = arith.addf %465, %466 : vector<2x128xf32>
    %468 = arith.mulf %467, %457 : vector<2x128xf32>
    %cst_166 = arith.constant -0.244536653 : f32
    %469 = vector.broadcast %cst_166 : f32 to vector<2x128xf32>
    %470 = arith.addf %468, %469 : vector<2x128xf32>
    %471 = arith.mulf %470, %457 : vector<2x128xf32>
    %cst_167 = arith.constant 0.332653254 : f32
    %472 = vector.broadcast %cst_167 : f32 to vector<2x128xf32>
    %473 = arith.addf %471, %472 : vector<2x128xf32>
    %474 = arith.mulf %473, %457 : vector<2x128xf32>
    %cst_168 = arith.constant -0.499963641 : f32
    %475 = vector.broadcast %cst_168 : f32 to vector<2x128xf32>
    %476 = arith.addf %474, %475 : vector<2x128xf32>
    %477 = arith.mulf %476, %457 : vector<2x128xf32>
    %cst_169 = arith.constant 0.999999523 : f32
    %478 = vector.broadcast %cst_169 : f32 to vector<2x128xf32>
    %479 = arith.addf %477, %478 : vector<2x128xf32>
    %480 = arith.mulf %457, %479 : vector<2x128xf32>
    %cst_170 = arith.constant 6.553600e+04 : f32
    %481 = vector.broadcast %cst_170 : f32 to vector<2x128xf32>
    %482 = arith.mulf %480, %481 : vector<2x128xf32>
    %483 = math.floor %482 : vector<2x128xf32>
    %cst_171 = arith.constant 1.52587891E-5 : f32
    %484 = vector.broadcast %cst_171 : f32 to vector<2x128xf32>
    %485 = arith.mulf %483, %484 : vector<2x128xf32>
    %486 = arith.addf %424, %485 : vector<2x128xf32>
    %cst_172 = arith.constant 7.937500e+00 : f32
    %487 = vector.broadcast %cst_172 : f32 to vector<2x128xf32>
    %488 = arith.minimumf %486, %487 : vector<2x128xf32>
    %cst_173 = arith.constant -8.000000e+00 : f32
    %489 = vector.broadcast %cst_173 : f32 to vector<2x128xf32>
    %490 = arith.maximumf %488, %489 : vector<2x128xf32>
    %c7_i32 = arith.constant 7 : i32
    %491 = arith.index_cast %c7_i32 : i32 to index
    %c0_174 = arith.constant 0 : index
    %c0_175 = arith.constant 0 : index
    %492 = vector.load %arg1[%491, %c0_174, %c0_175] : memref<8x2x128xf32, #tpu.memory_space<vmem>>, vector<1x2x128xf32>
    %493 = vector.shape_cast %492 : vector<1x2x128xf32> to vector<2x128xf32>
    %494 = arith.maximumf %490, %493 : vector<2x128xf32>
    %495 = arith.subf %490, %493 : vector<2x128xf32>
    %496 = math.absf %495 : vector<2x128xf32>
    %cst_176 = arith.constant 4.096000e+03 : f32
    %497 = vector.broadcast %cst_176 : f32 to vector<2x128xf32>
    %498 = arith.mulf %496, %497 : vector<2x128xf32>
    %499 = math.floor %498 : vector<2x128xf32>
    %cst_177 = arith.constant 3.276700e+04 : f32
    %500 = vector.broadcast %cst_177 : f32 to vector<2x128xf32>
    %501 = arith.minimumf %499, %500 : vector<2x128xf32>
    %cst_178 = arith.constant 2.44140625E-4 : f32
    %502 = vector.broadcast %cst_178 : f32 to vector<2x128xf32>
    %503 = arith.mulf %501, %502 : vector<2x128xf32>
    %cst_179 = arith.constant 1.250000e-01 : f32
    %504 = vector.broadcast %cst_179 : f32 to vector<2x128xf32>
    %505 = arith.mulf %503, %504 : vector<2x128xf32>
    %cst_180 = arith.constant 8.49453033E-4 : f32
    %506 = vector.broadcast %cst_180 : f32 to vector<2x128xf32>
    %507 = arith.mulf %506, %505 : vector<2x128xf32>
    %cst_181 = arith.constant -0.00765160844 : f32
    %508 = vector.broadcast %cst_181 : f32 to vector<2x128xf32>
    %509 = arith.addf %507, %508 : vector<2x128xf32>
    %510 = arith.mulf %509, %505 : vector<2x128xf32>
    %cst_182 = arith.constant 0.0412146635 : f32
    %511 = vector.broadcast %cst_182 : f32 to vector<2x128xf32>
    %512 = arith.addf %510, %511 : vector<2x128xf32>
    %513 = arith.mulf %512, %505 : vector<2x128xf32>
    %cst_183 = arith.constant -0.166506827 : f32
    %514 = vector.broadcast %cst_183 : f32 to vector<2x128xf32>
    %515 = arith.addf %513, %514 : vector<2x128xf32>
    %516 = arith.mulf %515, %505 : vector<2x128xf32>
    %cst_184 = arith.constant 0.499971777 : f32
    %517 = vector.broadcast %cst_184 : f32 to vector<2x128xf32>
    %518 = arith.addf %516, %517 : vector<2x128xf32>
    %519 = arith.mulf %518, %505 : vector<2x128xf32>
    %cst_185 = arith.constant -0.999997913 : f32
    %520 = vector.broadcast %cst_185 : f32 to vector<2x128xf32>
    %521 = arith.addf %519, %520 : vector<2x128xf32>
    %522 = arith.mulf %521, %505 : vector<2x128xf32>
    %cst_186 = arith.constant 0.99999994 : f32
    %523 = vector.broadcast %cst_186 : f32 to vector<2x128xf32>
    %524 = arith.addf %522, %523 : vector<2x128xf32>
    %525 = arith.mulf %524, %524 : vector<2x128xf32>
    %526 = arith.mulf %525, %525 : vector<2x128xf32>
    %527 = arith.mulf %526, %526 : vector<2x128xf32>
    %cst_187 = arith.constant -0.00846708752 : f32
    %528 = vector.broadcast %cst_187 : f32 to vector<2x128xf32>
    %529 = arith.mulf %528, %527 : vector<2x128xf32>
    %cst_188 = arith.constant 0.0436626226 : f32
    %530 = vector.broadcast %cst_188 : f32 to vector<2x128xf32>
    %531 = arith.addf %529, %530 : vector<2x128xf32>
    %532 = arith.mulf %531, %527 : vector<2x128xf32>
    %cst_189 = arith.constant -0.106805518 : f32
    %533 = vector.broadcast %cst_189 : f32 to vector<2x128xf32>
    %534 = arith.addf %532, %533 : vector<2x128xf32>
    %535 = arith.mulf %534, %527 : vector<2x128xf32>
    %cst_190 = arith.constant 0.176604345 : f32
    %536 = vector.broadcast %cst_190 : f32 to vector<2x128xf32>
    %537 = arith.addf %535, %536 : vector<2x128xf32>
    %538 = arith.mulf %537, %527 : vector<2x128xf32>
    %cst_191 = arith.constant -0.244536653 : f32
    %539 = vector.broadcast %cst_191 : f32 to vector<2x128xf32>
    %540 = arith.addf %538, %539 : vector<2x128xf32>
    %541 = arith.mulf %540, %527 : vector<2x128xf32>
    %cst_192 = arith.constant 0.332653254 : f32
    %542 = vector.broadcast %cst_192 : f32 to vector<2x128xf32>
    %543 = arith.addf %541, %542 : vector<2x128xf32>
    %544 = arith.mulf %543, %527 : vector<2x128xf32>
    %cst_193 = arith.constant -0.499963641 : f32
    %545 = vector.broadcast %cst_193 : f32 to vector<2x128xf32>
    %546 = arith.addf %544, %545 : vector<2x128xf32>
    %547 = arith.mulf %546, %527 : vector<2x128xf32>
    %cst_194 = arith.constant 0.999999523 : f32
    %548 = vector.broadcast %cst_194 : f32 to vector<2x128xf32>
    %549 = arith.addf %547, %548 : vector<2x128xf32>
    %550 = arith.mulf %527, %549 : vector<2x128xf32>
    %cst_195 = arith.constant 6.553600e+04 : f32
    %551 = vector.broadcast %cst_195 : f32 to vector<2x128xf32>
    %552 = arith.mulf %550, %551 : vector<2x128xf32>
    %553 = math.floor %552 : vector<2x128xf32>
    %cst_196 = arith.constant 1.52587891E-5 : f32
    %554 = vector.broadcast %cst_196 : f32 to vector<2x128xf32>
    %555 = arith.mulf %553, %554 : vector<2x128xf32>
    %556 = arith.addf %494, %555 : vector<2x128xf32>
    %cst_197 = arith.constant 7.937500e+00 : f32
    %557 = vector.broadcast %cst_197 : f32 to vector<2x128xf32>
    %558 = arith.minimumf %556, %557 : vector<2x128xf32>
    %cst_198 = arith.constant -8.000000e+00 : f32
    %559 = vector.broadcast %cst_198 : f32 to vector<2x128xf32>
    %560 = arith.maximumf %558, %559 : vector<2x128xf32>
    %c8_i32 = arith.constant 8 : i32
    %c0_i32_199 = arith.constant 0 : i32
    %561 = arith.index_cast %c0_i32_199 : i32 to index
    %c0_200 = arith.constant 0 : index
    %c0_201 = arith.constant 0 : index
    %562 = vector.load %arg1[%561, %c0_200, %c0_201] : memref<8x2x128xf32, #tpu.memory_space<vmem>>, vector<1x2x128xf32>
    %563 = vector.shape_cast %562 : vector<1x2x128xf32> to vector<2x128xf32>
    %564 = arith.subf %563, %560 : vector<2x128xf32>
    %cst_202 = arith.constant 1.600000e+01 : f32
    %565 = vector.broadcast %cst_202 : f32 to vector<2x128xf32>
    %566 = arith.mulf %564, %565 : vector<2x128xf32>
    %567 = math.roundeven %566 : vector<2x128xf32>
    %cst_203 = arith.constant -1.280000e+02 : f32
    %cst_204 = arith.constant 1.270000e+02 : f32
    %568 = vector.broadcast %cst_203 : f32 to vector<2x128xf32>
    %569 = arith.maximumf %568, %567 : vector<2x128xf32>
    %570 = vector.broadcast %cst_204 : f32 to vector<2x128xf32>
    %571 = arith.minimumf %570, %569 : vector<2x128xf32>
    %cst_205 = arith.constant 6.250000e-02 : f32
    %572 = vector.broadcast %cst_205 : f32 to vector<2x128xf32>
    %573 = arith.mulf %571, %572 : vector<2x128xf32>
    %574 = arith.index_cast %c0_i32_199 : i32 to index
    %c0_206 = arith.constant 0 : index
    %c0_207 = arith.constant 0 : index
    %575 = vector.load %arg2[%574, %c0_206, %c0_207] : memref<8x2x128xf32, #tpu.memory_space<vmem>>, vector<1x2x128xf32>
    %576 = vector.shape_cast %575 : vector<1x2x128xf32> to vector<2x128xf32>
    %577 = vector.shape_cast %573 : vector<2x128xf32> to vector<1x2x128xf32>
    tpu.vector_store %arg2[%574, %c0_206, %c0_207], %577 {strides = array<i32>} : memref<8x2x128xf32, #tpu.memory_space<vmem>>, vector<1x2x128xf32>,
    %c1_i32_208 = arith.constant 1 : i32
    %578 = arith.index_cast %c1_i32_208 : i32 to index
    %c0_209 = arith.constant 0 : index
    %c0_210 = arith.constant 0 : index
    %579 = vector.load %arg1[%578, %c0_209, %c0_210] : memref<8x2x128xf32, #tpu.memory_space<vmem>>, vector<1x2x128xf32>
    %580 = vector.shape_cast %579 : vector<1x2x128xf32> to vector<2x128xf32>
    %581 = arith.subf %580, %560 : vector<2x128xf32>
    %cst_211 = arith.constant 1.600000e+01 : f32
    %582 = vector.broadcast %cst_211 : f32 to vector<2x128xf32>
    %583 = arith.mulf %581, %582 : vector<2x128xf32>
    %584 = math.roundeven %583 : vector<2x128xf32>
    %cst_212 = arith.constant -1.280000e+02 : f32
    %cst_213 = arith.constant 1.270000e+02 : f32
    %585 = vector.broadcast %cst_212 : f32 to vector<2x128xf32>
    %586 = arith.maximumf %585, %584 : vector<2x128xf32>
    %587 = vector.broadcast %cst_213 : f32 to vector<2x128xf32>
    %588 = arith.minimumf %587, %586 : vector<2x128xf32>
    %cst_214 = arith.constant 6.250000e-02 : f32
    %589 = vector.broadcast %cst_214 : f32 to vector<2x128xf32>
    %590 = arith.mulf %588, %589 : vector<2x128xf32>
    %591 = arith.index_cast %c1_i32_208 : i32 to index
    %c0_215 = arith.constant 0 : index
    %c0_216 = arith.constant 0 : index
    %592 = vector.load %arg2[%591, %c0_215, %c0_216] : memref<8x2x128xf32, #tpu.memory_space<vmem>>, vector<1x2x128xf32>
    %593 = vector.shape_cast %592 : vector<1x2x128xf32> to vector<2x128xf32>
    %594 = vector.shape_cast %590 : vector<2x128xf32> to vector<1x2x128xf32>
    tpu.vector_store %arg2[%591, %c0_215, %c0_216], %594 {strides = array<i32>} : memref<8x2x128xf32, #tpu.memory_space<vmem>>, vector<1x2x128xf32>,
    %c2_i32_217 = arith.constant 2 : i32
    %595 = arith.index_cast %c2_i32_217 : i32 to index
    %c0_218 = arith.constant 0 : index
    %c0_219 = arith.constant 0 : index
    %596 = vector.load %arg1[%595, %c0_218, %c0_219] : memref<8x2x128xf32, #tpu.memory_space<vmem>>, vector<1x2x128xf32>
    %597 = vector.shape_cast %596 : vector<1x2x128xf32> to vector<2x128xf32>
    %598 = arith.subf %597, %560 : vector<2x128xf32>
    %cst_220 = arith.constant 1.600000e+01 : f32
    %599 = vector.broadcast %cst_220 : f32 to vector<2x128xf32>
    %600 = arith.mulf %598, %599 : vector<2x128xf32>
    %601 = math.roundeven %600 : vector<2x128xf32>
    %cst_221 = arith.constant -1.280000e+02 : f32
    %cst_222 = arith.constant 1.270000e+02 : f32
    %602 = vector.broadcast %cst_221 : f32 to vector<2x128xf32>
    %603 = arith.maximumf %602, %601 : vector<2x128xf32>
    %604 = vector.broadcast %cst_222 : f32 to vector<2x128xf32>
    %605 = arith.minimumf %604, %603 : vector<2x128xf32>
    %cst_223 = arith.constant 6.250000e-02 : f32
    %606 = vector.broadcast %cst_223 : f32 to vector<2x128xf32>
    %607 = arith.mulf %605, %606 : vector<2x128xf32>
    %608 = arith.index_cast %c2_i32_217 : i32 to index
    %c0_224 = arith.constant 0 : index
    %c0_225 = arith.constant 0 : index
    %609 = vector.load %arg2[%608, %c0_224, %c0_225] : memref<8x2x128xf32, #tpu.memory_space<vmem>>, vector<1x2x128xf32>
    %610 = vector.shape_cast %609 : vector<1x2x128xf32> to vector<2x128xf32>
    %611 = vector.shape_cast %607 : vector<2x128xf32> to vector<1x2x128xf32>
    tpu.vector_store %arg2[%608, %c0_224, %c0_225], %611 {strides = array<i32>} : memref<8x2x128xf32, #tpu.memory_space<vmem>>, vector<1x2x128xf32>,
    %c3_i32_226 = arith.constant 3 : i32
    %612 = arith.index_cast %c3_i32_226 : i32 to index
    %c0_227 = arith.constant 0 : index
    %c0_228 = arith.constant 0 : index
    %613 = vector.load %arg1[%612, %c0_227, %c0_228] : memref<8x2x128xf32, #tpu.memory_space<vmem>>, vector<1x2x128xf32>
    %614 = vector.shape_cast %613 : vector<1x2x128xf32> to vector<2x128xf32>
    %615 = arith.subf %614, %560 : vector<2x128xf32>
    %cst_229 = arith.constant 1.600000e+01 : f32
    %616 = vector.broadcast %cst_229 : f32 to vector<2x128xf32>
    %617 = arith.mulf %615, %616 : vector<2x128xf32>
    %618 = math.roundeven %617 : vector<2x128xf32>
    %cst_230 = arith.constant -1.280000e+02 : f32
    %cst_231 = arith.constant 1.270000e+02 : f32
    %619 = vector.broadcast %cst_230 : f32 to vector<2x128xf32>
    %620 = arith.maximumf %619, %618 : vector<2x128xf32>
    %621 = vector.broadcast %cst_231 : f32 to vector<2x128xf32>
    %622 = arith.minimumf %621, %620 : vector<2x128xf32>
    %cst_232 = arith.constant 6.250000e-02 : f32
    %623 = vector.broadcast %cst_232 : f32 to vector<2x128xf32>
    %624 = arith.mulf %622, %623 : vector<2x128xf32>
    %625 = arith.index_cast %c3_i32_226 : i32 to index
    %c0_233 = arith.constant 0 : index
    %c0_234 = arith.constant 0 : index
    %626 = vector.load %arg2[%625, %c0_233, %c0_234] : memref<8x2x128xf32, #tpu.memory_space<vmem>>, vector<1x2x128xf32>
    %627 = vector.shape_cast %626 : vector<1x2x128xf32> to vector<2x128xf32>
    %628 = vector.shape_cast %624 : vector<2x128xf32> to vector<1x2x128xf32>
    tpu.vector_store %arg2[%625, %c0_233, %c0_234], %628 {strides = array<i32>} : memref<8x2x128xf32, #tpu.memory_space<vmem>>, vector<1x2x128xf32>,
    %c4_i32_235 = arith.constant 4 : i32
    %629 = arith.index_cast %c4_i32_235 : i32 to index
    %c0_236 = arith.constant 0 : index
    %c0_237 = arith.constant 0 : index
    %630 = vector.load %arg1[%629, %c0_236, %c0_237] : memref<8x2x128xf32, #tpu.memory_space<vmem>>, vector<1x2x128xf32>
    %631 = vector.shape_cast %630 : vector<1x2x128xf32> to vector<2x128xf32>
    %632 = arith.subf %631, %560 : vector<2x128xf32>
    %cst_238 = arith.constant 1.600000e+01 : f32
    %633 = vector.broadcast %cst_238 : f32 to vector<2x128xf32>
    %634 = arith.mulf %632, %633 : vector<2x128xf32>
    %635 = math.roundeven %634 : vector<2x128xf32>
    %cst_239 = arith.constant -1.280000e+02 : f32
    %cst_240 = arith.constant 1.270000e+02 : f32
    %636 = vector.broadcast %cst_239 : f32 to vector<2x128xf32>
    %637 = arith.maximumf %636, %635 : vector<2x128xf32>
    %638 = vector.broadcast %cst_240 : f32 to vector<2x128xf32>
    %639 = arith.minimumf %638, %637 : vector<2x128xf32>
    %cst_241 = arith.constant 6.250000e-02 : f32
    %640 = vector.broadcast %cst_241 : f32 to vector<2x128xf32>
    %641 = arith.mulf %639, %640 : vector<2x128xf32>
    %642 = arith.index_cast %c4_i32_235 : i32 to index
    %c0_242 = arith.constant 0 : index
    %c0_243 = arith.constant 0 : index
    %643 = vector.load %arg2[%642, %c0_242, %c0_243] : memref<8x2x128xf32, #tpu.memory_space<vmem>>, vector<1x2x128xf32>
    %644 = vector.shape_cast %643 : vector<1x2x128xf32> to vector<2x128xf32>
    %645 = vector.shape_cast %641 : vector<2x128xf32> to vector<1x2x128xf32>
    tpu.vector_store %arg2[%642, %c0_242, %c0_243], %645 {strides = array<i32>} : memref<8x2x128xf32, #tpu.memory_space<vmem>>, vector<1x2x128xf32>,
    %c5_i32_244 = arith.constant 5 : i32
    %646 = arith.index_cast %c5_i32_244 : i32 to index
    %c0_245 = arith.constant 0 : index
    %c0_246 = arith.constant 0 : index
    %647 = vector.load %arg1[%646, %c0_245, %c0_246] : memref<8x2x128xf32, #tpu.memory_space<vmem>>, vector<1x2x128xf32>
    %648 = vector.shape_cast %647 : vector<1x2x128xf32> to vector<2x128xf32>
    %649 = arith.subf %648, %560 : vector<2x128xf32>
    %cst_247 = arith.constant 1.600000e+01 : f32
    %650 = vector.broadcast %cst_247 : f32 to vector<2x128xf32>
    %651 = arith.mulf %649, %650 : vector<2x128xf32>
    %652 = math.roundeven %651 : vector<2x128xf32>
    %cst_248 = arith.constant -1.280000e+02 : f32
    %cst_249 = arith.constant 1.270000e+02 : f32
    %653 = vector.broadcast %cst_248 : f32 to vector<2x128xf32>
    %654 = arith.maximumf %653, %652 : vector<2x128xf32>
    %655 = vector.broadcast %cst_249 : f32 to vector<2x128xf32>
    %656 = arith.minimumf %655, %654 : vector<2x128xf32>
    %cst_250 = arith.constant 6.250000e-02 : f32
    %657 = vector.broadcast %cst_250 : f32 to vector<2x128xf32>
    %658 = arith.mulf %656, %657 : vector<2x128xf32>
    %659 = arith.index_cast %c5_i32_244 : i32 to index
    %c0_251 = arith.constant 0 : index
    %c0_252 = arith.constant 0 : index
    %660 = vector.load %arg2[%659, %c0_251, %c0_252] : memref<8x2x128xf32, #tpu.memory_space<vmem>>, vector<1x2x128xf32>
    %661 = vector.shape_cast %660 : vector<1x2x128xf32> to vector<2x128xf32>
    %662 = vector.shape_cast %658 : vector<2x128xf32> to vector<1x2x128xf32>
    tpu.vector_store %arg2[%659, %c0_251, %c0_252], %662 {strides = array<i32>} : memref<8x2x128xf32, #tpu.memory_space<vmem>>, vector<1x2x128xf32>,
    %c6_i32_253 = arith.constant 6 : i32
    %663 = arith.index_cast %c6_i32_253 : i32 to index
    %c0_254 = arith.constant 0 : index
    %c0_255 = arith.constant 0 : index
    %664 = vector.load %arg1[%663, %c0_254, %c0_255] : memref<8x2x128xf32, #tpu.memory_space<vmem>>, vector<1x2x128xf32>
    %665 = vector.shape_cast %664 : vector<1x2x128xf32> to vector<2x128xf32>
    %666 = arith.subf %665, %560 : vector<2x128xf32>
    %cst_256 = arith.constant 1.600000e+01 : f32
    %667 = vector.broadcast %cst_256 : f32 to vector<2x128xf32>
    %668 = arith.mulf %666, %667 : vector<2x128xf32>
    %669 = math.roundeven %668 : vector<2x128xf32>
    %cst_257 = arith.constant -1.280000e+02 : f32
    %cst_258 = arith.constant 1.270000e+02 : f32
    %670 = vector.broadcast %cst_257 : f32 to vector<2x128xf32>
    %671 = arith.maximumf %670, %669 : vector<2x128xf32>
    %672 = vector.broadcast %cst_258 : f32 to vector<2x128xf32>
    %673 = arith.minimumf %672, %671 : vector<2x128xf32>
    %cst_259 = arith.constant 6.250000e-02 : f32
    %674 = vector.broadcast %cst_259 : f32 to vector<2x128xf32>
    %675 = arith.mulf %673, %674 : vector<2x128xf32>
    %676 = arith.index_cast %c6_i32_253 : i32 to index
    %c0_260 = arith.constant 0 : index
    %c0_261 = arith.constant 0 : index
    %677 = vector.load %arg2[%676, %c0_260, %c0_261] : memref<8x2x128xf32, #tpu.memory_space<vmem>>, vector<1x2x128xf32>
    %678 = vector.shape_cast %677 : vector<1x2x128xf32> to vector<2x128xf32>
    %679 = vector.shape_cast %675 : vector<2x128xf32> to vector<1x2x128xf32>
    tpu.vector_store %arg2[%676, %c0_260, %c0_261], %679 {strides = array<i32>} : memref<8x2x128xf32, #tpu.memory_space<vmem>>, vector<1x2x128xf32>,
    %c7_i32_262 = arith.constant 7 : i32
    %680 = arith.index_cast %c7_i32_262 : i32 to index
    %c0_263 = arith.constant 0 : index
    %c0_264 = arith.constant 0 : index
    %681 = vector.load %arg1[%680, %c0_263, %c0_264] : memref<8x2x128xf32, #tpu.memory_space<vmem>>, vector<1x2x128xf32>
    %682 = vector.shape_cast %681 : vector<1x2x128xf32> to vector<2x128xf32>
    %683 = arith.subf %682, %560 : vector<2x128xf32>
    %cst_265 = arith.constant 1.600000e+01 : f32
    %684 = vector.broadcast %cst_265 : f32 to vector<2x128xf32>
    %685 = arith.mulf %683, %684 : vector<2x128xf32>
    %686 = math.roundeven %685 : vector<2x128xf32>
    %cst_266 = arith.constant -1.280000e+02 : f32
    %cst_267 = arith.constant 1.270000e+02 : f32
    %687 = vector.broadcast %cst_266 : f32 to vector<2x128xf32>
    %688 = arith.maximumf %687, %686 : vector<2x128xf32>
    %689 = vector.broadcast %cst_267 : f32 to vector<2x128xf32>
    %690 = arith.minimumf %689, %688 : vector<2x128xf32>
    %cst_268 = arith.constant 6.250000e-02 : f32
    %691 = vector.broadcast %cst_268 : f32 to vector<2x128xf32>
    %692 = arith.mulf %690, %691 : vector<2x128xf32>
    %693 = arith.index_cast %c7_i32_262 : i32 to index
    %c0_269 = arith.constant 0 : index
    %c0_270 = arith.constant 0 : index
    %694 = vector.load %arg2[%693, %c0_269, %c0_270] : memref<8x2x128xf32, #tpu.memory_space<vmem>>, vector<1x2x128xf32>
    %695 = vector.shape_cast %694 : vector<1x2x128xf32> to vector<2x128xf32>
    %696 = vector.shape_cast %692 : vector<2x128xf32> to vector<1x2x128xf32>
    tpu.vector_store %arg2[%693, %c0_269, %c0_270], %696 {strides = array<i32>} : memref<8x2x128xf32, #tpu.memory_space<vmem>>, vector<1x2x128xf32>,
    %c8_i32_271 = arith.constant 8 : i32
    return
  }
  func.func @transform_0(%arg0: i32) -> (i32, i32, i32) {
    %c0_i32 = arith.constant 0 : i32
    %c0_i32_0 = arith.constant 0 : i32
    %c0_i32_1 = arith.constant 0 : i32
    return %c0_i32, %arg0, %c0_i32_0 : i32, i32, i32
  }
  func.func @transform_1(%arg0: i32) -> (i32, i32, i32) {
    %c0_i32 = arith.constant 0 : i32
    %c0_i32_0 = arith.constant 0 : i32
    %c0_i32_1 = arith.constant 0 : i32
    return %c0_i32, %arg0, %c0_i32_0 : i32, i32, i32
  }
}

</mosaic_0001>

<llo_original>
// kernel: tpu_custom_call.1
$region0: #{tpu_custom_call.1}
  #allocation0 [shape = 'u32[]', space=smem, size = 0x4, offset = 0x4, fixed_abs, tag = 'smem constant byte address 0x4 - core index']
  #allocation1 [shape = 'u32[144,128]{1,0:T(1,128)}', space=vmem, size = 0x12000, scoped, tag = 'internal scratch']
  %s0 = inlined_call_operand.hbm [shape: f32[8,2,128], index: 0, kind: input, shape index: {}]
  %s1 = inlined_call_operand.hbm [shape: f32[8,2,128], index: 1, kind: output, shape index: {}]
  %s2 = sld [smem:[#allocation0]]
  $region18: #{tpu_custom_call.1} parent=0
    _
  %s4 = ssub.s32 1, %s2
  %s5 = scalar_select 0, %s4, %s2
  $region1: #{tpu_custom_call.1} parent=0
    #allocation2 [shape = 'u8[8192]{0}', space=vmem, size = 0x2000, scoped, tag = 'input window, operand 0, single buffered']
    #allocation3 [shape = 's32[1]{0}', space=sflag, size = 0x4, scoped, tag = 'scoped memory for tpu_custom_call.1']
    #allocation4 [shape = 's32[1]{0}', space=sflag, size = 0x4, scoped, tag = 'scoped memory for tpu_custom_call.1']
    #allocation5 [shape = 'u8[8192]{0}', space=vmem, size = 0x2000, scoped, tag = 'output window, operand 0, single buffered']
    %6 = vsyncpa [#allocation3], 0
    %7 = vsyncpa [#allocation4], 0
    // Predicated region
    $region2: #{tpu_custom_call.1} parent=1 // pred_check
      _
    $region3: #{tpu_custom_call.1} parent=1 // pred_check_branch
      %9 = sbr.rel (0) target = $region5
    $region4: #{tpu_custom_call.1} parent=1 // pred_region
      %s11 = ssub.s32 256, 256
      %12 = vsyncadd [#allocation3], %s11
      %s13 = sshll.u32 [#allocation2], 4
      %s14 = int_to_ptr.vmem [resolvable:$true] %s13
      %19 = dma.hbm_to_vmem [thread:$0]  %s0, 256, %s14, [#allocation3], 32, 32, 2
    $region5: #{tpu_custom_call.1} parent=1 // pred_fallthru
      _
    // Predicated region
    $region6: #{tpu_custom_call.1} parent=1 // pred_check
      _
    $region7: #{tpu_custom_call.1} parent=1 // pred_check_branch
      %21 = sbr.rel (0) target = $region9
    $region8: #{tpu_custom_call.1} parent=1 // pred_region
      %22 = dma.done [#allocation3], 256
    $region9: #{tpu_custom_call.1} parent=1 // pred_fallthru
      _
    %v23 = vld [vmem:[#allocation2] sm:$0x3]
    %v24 = vmax.f32 %v23, -8.0
    %v25 = vsub.f32 -8.0, %v23
    %v26 = vand.u32 2147483647, %v25
    %v27 = vmul.f32 %v26, 4096.0
    %v28 = vfloor.f32 %v27
    %v29 = vmin.f32 %v28, 32767.0
    %v30 = vmul.f32 %v29, 0.00024414063
    %v31 = vmul.f32 %v30, 0.125
    %v32 = vmul.f32 %v31, 0.00084945303
    %v33 = vadd.f32 %v32, -0.0076516084
    %v34 = vmul.f32 %v33, %v31
    %v35 = vadd.f32 %v34, 0.041214664
    %v36 = vmul.f32 %v35, %v31
    %v37 = vadd.f32 %v36, -0.16650683
    %v38 = vmul.f32 %v37, %v31
    %v39 = vadd.f32 %v38, 0.49997178
    %v40 = vmul.f32 %v39, %v31
    %v41 = vadd.f32 %v40, -0.9999979
    %v42 = vmul.f32 %v41, %v31
    %v43 = vadd.f32 %v42, 0.99999994
    %v44 = vmul.f32 %v43, %v43
    %v45 = vmul.f32 %v44, %v44
    %v46 = vmul.f32 %v45, %v45
    %v47 = vmul.f32 %v46, -0.0084670875
    %v48 = vadd.f32 %v47, 0.043662623
    %v49 = vmul.f32 %v48, %v46
    %v50 = vadd.f32 %v49, -0.10680552
    %v51 = vmul.f32 %v50, %v46
    %v52 = vadd.f32 %v51, 0.17660435
    %v53 = vmul.f32 %v52, %v46
    %v54 = vadd.f32 %v53, -0.24453665
    %v55 = vmul.f32 %v54, %v46
    %v56 = vadd.f32 %v55, 0.33265325
    %v57 = vmul.f32 %v56, %v46
    %v58 = vadd.f32 %v57, -0.49996364
    %v59 = vmul.f32 %v58, %v46
    %v60 = vadd.f32 %v59, 0.9999995
    %v61 = vmul.f32 %v46, %v60
    %v62 = vmul.f32 %v61, 65536.0
    %v63 = vfloor.f32 %v62
    %v64 = vmul.f32 %v63, 1.5258789e-05
    %v65 = vadd.f32 %v24, %v64
    %v66 = vmin.f32 %v65, 7.9375
    %v67 = vmax.f32 %v66, -8.0
    %s68 = scalar_lea.vmem [#allocation2], 2
    %v69 = vld [vmem:[%s68] sm:$0x3]
    %v70 = vmax.f32 %v67, %v69
    %v71 = vsub.f32 %v67, %v69
    %v72 = vand.u32 2147483647, %v71
    %v73 = vmul.f32 %v72, 4096.0
    %v74 = vfloor.f32 %v73
    %v75 = vmin.f32 %v74, 32767.0
    %v76 = vmul.f32 %v75, 0.00024414063
    %v77 = vmul.f32 %v76, 0.125
    %v78 = vmul.f32 %v77, 0.00084945303
    %v79 = vadd.f32 %v78, -0.0076516084
    %v80 = vmul.f32 %v79, %v77
    %v81 = vadd.f32 %v80, 0.041214664
    %v82 = vmul.f32 %v81, %v77
    %v83 = vadd.f32 %v82, -0.16650683
    %v84 = vmul.f32 %v83, %v77
    %v85 = vadd.f32 %v84, 0.49997178
    %v86 = vmul.f32 %v85, %v77
    %v87 = vadd.f32 %v86, -0.9999979
    %v88 = vmul.f32 %v87, %v77
    %v89 = vadd.f32 %v88, 0.99999994
    %v90 = vmul.f32 %v89, %v89
    %v91 = vmul.f32 %v90, %v90
    %v92 = vmul.f32 %v91, %v91
    %v93 = vmul.f32 %v92, -0.0084670875
    %v94 = vadd.f32 %v93, 0.043662623
    %v95 = vmul.f32 %v94, %v92
    %v96 = vadd.f32 %v95, -0.10680552
    %v97 = vmul.f32 %v96, %v92
    %v98 = vadd.f32 %v97, 0.17660435
    %v99 = vmul.f32 %v98, %v92
    %v100 = vadd.f32 %v99, -0.24453665
    %v101 = vmul.f32 %v100, %v92
    %v102 = vadd.f32 %v101, 0.33265325
    %v103 = vmul.f32 %v102, %v92
    %v104 = vadd.f32 %v103, -0.49996364
    %v105 = vmul.f32 %v104, %v92
    %v106 = vadd.f32 %v105, 0.9999995
    %v107 = vmul.f32 %v92, %v106
    %v108 = vmul.f32 %v107, 65536.0
    %v109 = vfloor.f32 %v108
    %v110 = vmul.f32 %v109, 1.5258789e-05
    %v111 = vadd.f32 %v70, %v110
    %v112 = vmin.f32 %v111, 7.9375
    %v113 = vmax.f32 %v112, -8.0
    %s114 = scalar_lea.vmem [#allocation2], 4
    %v115 = vld [vmem:[%s114] sm:$0x3]
    %v116 = vmax.f32 %v113, %v115
    %v117 = vsub.f32 %v113, %v115
    %v118 = vand.u32 2147483647, %v117
    %v119 = vmul.f32 %v118, 4096.0
    %v120 = vfloor.f32 %v119
    %v121 = vmin.f32 %v120, 32767.0
    %v122 = vmul.f32 %v121, 0.00024414063
    %v123 = vmul.f32 %v122, 0.125
    %v124 = vmul.f32 %v123, 0.00084945303
    %v125 = vadd.f32 %v124, -0.0076516084
    %v126 = vmul.f32 %v125, %v123
    %v127 = vadd.f32 %v126, 0.041214664
    %v128 = vmul.f32 %v127, %v123
    %v129 = vadd.f32 %v128, -0.16650683
    %v130 = vmul.f32 %v129, %v123
    %v131 = vadd.f32 %v130, 0.49997178
    %v132 = vmul.f32 %v131, %v123
    %v133 = vadd.f32 %v132, -0.9999979
    %v134 = vmul.f32 %v133, %v123
    %v135 = vadd.f32 %v134, 0.99999994
    %v136 = vmul.f32 %v135, %v135
    %v137 = vmul.f32 %v136, %v136
    %v138 = vmul.f32 %v137, %v137
    %v139 = vmul.f32 %v138, -0.0084670875
    %v140 = vadd.f32 %v139, 0.043662623
    %v141 = vmul.f32 %v140, %v138
    %v142 = vadd.f32 %v141, -0.10680552
    %v143 = vmul.f32 %v142, %v138
    %v144 = vadd.f32 %v143, 0.17660435
    %v145 = vmul.f32 %v144, %v138
    %v146 = vadd.f32 %v145, -0.24453665
    %v147 = vmul.f32 %v146, %v138
    %v148 = vadd.f32 %v147, 0.33265325
    %v149 = vmul.f32 %v148, %v138
    %v150 = vadd.f32 %v149, -0.49996364
    %v151 = vmul.f32 %v150, %v138
    %v152 = vadd.f32 %v151, 0.9999995
    %v153 = vmul.f32 %v138, %v152
    %v154 = vmul.f32 %v153, 65536.0
    %v155 = vfloor.f32 %v154
    %v156 = vmul.f32 %v155, 1.5258789e-05
    %v157 = vadd.f32 %v116, %v156
    %v158 = vmin.f32 %v157, 7.9375
    %v159 = vmax.f32 %v158, -8.0
    %s160 = scalar_lea.vmem [#allocation2], 6
    %v161 = vld [vmem:[%s160] sm:$0x3]
    %v162 = vmax.f32 %v159, %v161
    %v163 = vsub.f32 %v159, %v161
    %v164 = vand.u32 2147483647, %v163
    %v165 = vmul.f32 %v164, 4096.0
    %v166 = vfloor.f32 %v165
    %v167 = vmin.f32 %v166, 32767.0
    %v168 = vmul.f32 %v167, 0.00024414063
    %v169 = vmul.f32 %v168, 0.125
    %v170 = vmul.f32 %v169, 0.00084945303
    %v171 = vadd.f32 %v170, -0.0076516084
    %v172 = vmul.f32 %v171, %v169
    %v173 = vadd.f32 %v172, 0.041214664
    %v174 = vmul.f32 %v173, %v169
    %v175 = vadd.f32 %v174, -0.16650683
    %v176 = vmul.f32 %v175, %v169
    %v177 = vadd.f32 %v176, 0.49997178
    %v178 = vmul.f32 %v177, %v169
    %v179 = vadd.f32 %v178, -0.9999979
    %v180 = vmul.f32 %v179, %v169
    %v181 = vadd.f32 %v180, 0.99999994
    %v182 = vmul.f32 %v181, %v181
    %v183 = vmul.f32 %v182, %v182
    %v184 = vmul.f32 %v183, %v183
    %v185 = vmul.f32 %v184, -0.0084670875
    %v186 = vadd.f32 %v185, 0.043662623
    %v187 = vmul.f32 %v186, %v184
    %v188 = vadd.f32 %v187, -0.10680552
    %v189 = vmul.f32 %v188, %v184
    %v190 = vadd.f32 %v189, 0.17660435
    %v191 = vmul.f32 %v190, %v184
    %v192 = vadd.f32 %v191, -0.24453665
    %v193 = vmul.f32 %v192, %v184
    %v194 = vadd.f32 %v193, 0.33265325
    %v195 = vmul.f32 %v194, %v184
    %v196 = vadd.f32 %v195, -0.49996364
    %v197 = vmul.f32 %v196, %v184
    %v198 = vadd.f32 %v197, 0.9999995
    %v199 = vmul.f32 %v184, %v198
    %v200 = vmul.f32 %v199, 65536.0
    %v201 = vfloor.f32 %v200
    %v202 = vmul.f32 %v201, 1.5258789e-05
    %v203 = vadd.f32 %v162, %v202
    %v204 = vmin.f32 %v203, 7.9375
    %v205 = vmax.f32 %v204, -8.0
    %s206 = scalar_lea.vmem [#allocation2], 8
    %v207 = vld [vmem:[%s206] sm:$0x3]
    %v208 = vmax.f32 %v205, %v207
    %v209 = vsub.f32 %v205, %v207
    %v210 = vand.u32 2147483647, %v209
    %v211 = vmul.f32 %v210, 4096.0
    %v212 = vfloor.f32 %v211
    %v213 = vmin.f32 %v212, 32767.0
    %v214 = vmul.f32 %v213, 0.00024414063
    %v215 = vmul.f32 %v214, 0.125
    %v216 = vmul.f32 %v215, 0.00084945303
    %v217 = vadd.f32 %v216, -0.0076516084
    %v218 = vmul.f32 %v217, %v215
    %v219 = vadd.f32 %v218, 0.041214664
    %v220 = vmul.f32 %v219, %v215
    %v221 = vadd.f32 %v220, -0.16650683
    %v222 = vmul.f32 %v221, %v215
    %v223 = vadd.f32 %v222, 0.49997178
    %v224 = vmul.f32 %v223, %v215
    %v225 = vadd.f32 %v224, -0.9999979
    %v226 = vmul.f32 %v225, %v215
    %v227 = vadd.f32 %v226, 0.99999994
    %v228 = vmul.f32 %v227, %v227
    %v229 = vmul.f32 %v228, %v228
    %v230 = vmul.f32 %v229, %v229
    %v231 = vmul.f32 %v230, -0.0084670875
    %v232 = vadd.f32 %v231, 0.043662623
    %v233 = vmul.f32 %v232, %v230
    %v234 = vadd.f32 %v233, -0.10680552
    %v235 = vmul.f32 %v234, %v230
    %v236 = vadd.f32 %v235, 0.17660435
    %v237 = vmul.f32 %v236, %v230
    %v238 = vadd.f32 %v237, -0.24453665
    %v239 = vmul.f32 %v238, %v230
    %v240 = vadd.f32 %v239, 0.33265325
    %v241 = vmul.f32 %v240, %v230
    %v242 = vadd.f32 %v241, -0.49996364
    %v243 = vmul.f32 %v242, %v230
    %v244 = vadd.f32 %v243, 0.9999995
    %v245 = vmul.f32 %v230, %v244
    %v246 = vmul.f32 %v245, 65536.0
    %v247 = vfloor.f32 %v246
    %v248 = vmul.f32 %v247, 1.5258789e-05
    %v249 = vadd.f32 %v208, %v248
    %v250 = vmin.f32 %v249, 7.9375
    %v251 = vmax.f32 %v250, -8.0
    %s252 = scalar_lea.vmem [#allocation2], 10
    %v253 = vld [vmem:[%s252] sm:$0x3]
    %v254 = vmax.f32 %v251, %v253
    %v255 = vsub.f32 %v251, %v253
    %v256 = vand.u32 2147483647, %v255
    %v257 = vmul.f32 %v256, 4096.0
    %v258 = vfloor.f32 %v257
    %v259 = vmin.f32 %v258, 32767.0
    %v260 = vmul.f32 %v259, 0.00024414063
    %v261 = vmul.f32 %v260, 0.125
    %v262 = vmul.f32 %v261, 0.00084945303
    %v263 = vadd.f32 %v262, -0.0076516084
    %v264 = vmul.f32 %v263, %v261
    %v265 = vadd.f32 %v264, 0.041214664
    %v266 = vmul.f32 %v265, %v261
    %v267 = vadd.f32 %v266, -0.16650683
    %v268 = vmul.f32 %v267, %v261
    %v269 = vadd.f32 %v268, 0.49997178
    %v270 = vmul.f32 %v269, %v261
    %v271 = vadd.f32 %v270, -0.9999979
    %v272 = vmul.f32 %v271, %v261
    %v273 = vadd.f32 %v272, 0.99999994
    %v274 = vmul.f32 %v273, %v273
    %v275 = vmul.f32 %v274, %v274
    %v276 = vmul.f32 %v275, %v275
    %v277 = vmul.f32 %v276, -0.0084670875
    %v278 = vadd.f32 %v277, 0.043662623
    %v279 = vmul.f32 %v278, %v276
    %v280 = vadd.f32 %v279, -0.10680552
    %v281 = vmul.f32 %v280, %v276
    %v282 = vadd.f32 %v281, 0.17660435
    %v283 = vmul.f32 %v282, %v276
    %v284 = vadd.f32 %v283, -0.24453665
    %v285 = vmul.f32 %v284, %v276
    %v286 = vadd.f32 %v285, 0.33265325
    %v287 = vmul.f32 %v286, %v276
    %v288 = vadd.f32 %v287, -0.49996364
    %v289 = vmul.f32 %v288, %v276
    %v290 = vadd.f32 %v289, 0.9999995
    %v291 = vmul.f32 %v276, %v290
    %v292 = vmul.f32 %v291, 65536.0
    %v293 = vfloor.f32 %v292
    %v294 = vmul.f32 %v293, 1.5258789e-05
    %v295 = vadd.f32 %v254, %v294
    %v296 = vmin.f32 %v295, 7.9375
    %v297 = vmax.f32 %v296, -8.0
    %s298 = scalar_lea.vmem [#allocation2], 12
    %v299 = vld [vmem:[%s298] sm:$0x3]
    %v300 = vmax.f32 %v297, %v299
    %v301 = vsub.f32 %v297, %v299
    %v302 = vand.u32 2147483647, %v301
    %v303 = vmul.f32 %v302, 4096.0
    %v304 = vfloor.f32 %v303
    %v305 = vmin.f32 %v304, 32767.0
    %v306 = vmul.f32 %v305, 0.00024414063
    %v307 = vmul.f32 %v306, 0.125
    %v308 = vmul.f32 %v307, 0.00084945303
    %v309 = vadd.f32 %v308, -0.0076516084
    %v310 = vmul.f32 %v309, %v307
    %v311 = vadd.f32 %v310, 0.041214664
    %v312 = vmul.f32 %v311, %v307
    %v313 = vadd.f32 %v312, -0.16650683
    %v314 = vmul.f32 %v313, %v307
    %v315 = vadd.f32 %v314, 0.49997178
    %v316 = vmul.f32 %v315, %v307
    %v317 = vadd.f32 %v316, -0.9999979
    %v318 = vmul.f32 %v317, %v307
    %v319 = vadd.f32 %v318, 0.99999994
    %v320 = vmul.f32 %v319, %v319
    %v321 = vmul.f32 %v320, %v320
    %v322 = vmul.f32 %v321, %v321
    %v323 = vmul.f32 %v322, -0.0084670875
    %v324 = vadd.f32 %v323, 0.043662623
    %v325 = vmul.f32 %v324, %v322
    %v326 = vadd.f32 %v325, -0.10680552
    %v327 = vmul.f32 %v326, %v322
    %v328 = vadd.f32 %v327, 0.17660435
    %v329 = vmul.f32 %v328, %v322
    %v330 = vadd.f32 %v329, -0.24453665
    %v331 = vmul.f32 %v330, %v322
    %v332 = vadd.f32 %v331, 0.33265325
    %v333 = vmul.f32 %v332, %v322
    %v334 = vadd.f32 %v333, -0.49996364
    %v335 = vmul.f32 %v334, %v322
    %v336 = vadd.f32 %v335, 0.9999995
    %v337 = vmul.f32 %v322, %v336
    %v338 = vmul.f32 %v337, 65536.0
    %v339 = vfloor.f32 %v338
    %v340 = vmul.f32 %v339, 1.5258789e-05
    %v341 = vadd.f32 %v300, %v340
    %v342 = vmin.f32 %v341, 7.9375
    %v343 = vmax.f32 %v342, -8.0
    %s344 = scalar_lea.vmem [#allocation2], 14
    %v345 = vld [vmem:[%s344] sm:$0x3]
    %v346 = vmax.f32 %v343, %v345
    %v347 = vsub.f32 %v343, %v345
    %v348 = vand.u32 2147483647, %v347
    %v349 = vmul.f32 %v348, 4096.0
    %v350 = vfloor.f32 %v349
    %v351 = vmin.f32 %v350, 32767.0
    %v352 = vmul.f32 %v351, 0.00024414063
    %v353 = vmul.f32 %v352, 0.125
    %v354 = vmul.f32 %v353, 0.00084945303
    %v355 = vadd.f32 %v354, -0.0076516084
    %v356 = vmul.f32 %v355, %v353
    %v357 = vadd.f32 %v356, 0.041214664
    %v358 = vmul.f32 %v357, %v353
    %v359 = vadd.f32 %v358, -0.16650683
    %v360 = vmul.f32 %v359, %v353
    %v361 = vadd.f32 %v360, 0.49997178
    %v362 = vmul.f32 %v361, %v353
    %v363 = vadd.f32 %v362, -0.9999979
    %v364 = vmul.f32 %v363, %v353
    %v365 = vadd.f32 %v364, 0.99999994
    %v366 = vmul.f32 %v365, %v365
    %v367 = vmul.f32 %v366, %v366
    %v368 = vmul.f32 %v367, %v367
    %v369 = vmul.f32 %v368, -0.0084670875
    %v370 = vadd.f32 %v369, 0.043662623
    %v371 = vmul.f32 %v370, %v368
    %v372 = vadd.f32 %v371, -0.10680552
    %v373 = vmul.f32 %v372, %v368
    %v374 = vadd.f32 %v373, 0.17660435
    %v375 = vmul.f32 %v374, %v368
    %v376 = vadd.f32 %v375, -0.24453665
    %v377 = vmul.f32 %v376, %v368
    %v378 = vadd.f32 %v377, 0.33265325
    %v379 = vmul.f32 %v378, %v368
    %v380 = vadd.f32 %v379, -0.49996364
    %v381 = vmul.f32 %v380, %v368
    %v382 = vadd.f32 %v381, 0.9999995
    %v383 = vmul.f32 %v368, %v382
    %v384 = vmul.f32 %v383, 65536.0
    %v385 = vfloor.f32 %v384
    %v386 = vmul.f32 %v385, 1.5258789e-05
    %v387 = vadd.f32 %v346, %v386
    %v388 = vmin.f32 %v387, 7.9375
    %v389 = vmax.f32 %v388, -8.0
    %v390 = vsub.f32 %v23, %v389
    %v391 = vmul.f32 %v390, 16.0
    %v392 = vround.ne.pseudo %v391
    %v393 = vmax.f32 %v392, -128.0
    %v394 = vmin.f32 %v393, 127.0
    %v395 = vmul.f32 %v394, 0.0625
    %396 = vst [vmem:[#allocation5] sm:$0x3] %v395
    %v397 = vld [vmem:[%s68] sm:$0x3]
    %v398 = vsub.f32 %v397, %v389
    %v399 = vmul.f32 %v398, 16.0
    %v400 = vround.ne.pseudo %v399
    %v401 = vmax.f32 %v400, -128.0
    %v402 = vmin.f32 %v401, 127.0
    %v403 = vmul.f32 %v402, 0.0625
    %s404 = scalar_lea.vmem [#allocation5], 2
    %405 = vst [vmem:[%s404] sm:$0x3] %v403
    %v406 = vld [vmem:[%s114] sm:$0x3]
    %v407 = vsub.f32 %v406, %v389
    %v408 = vmul.f32 %v407, 16.0
    %v409 = vround.ne.pseudo %v408
    %v410 = vmax.f32 %v409, -128.0
    %v411 = vmin.f32 %v410, 127.0
    %v412 = vmul.f32 %v411, 0.0625
    %s413 = scalar_lea.vmem [#allocation5], 4
    %414 = vst [vmem:[%s413] sm:$0x3] %v412
    %v415 = vld [vmem:[%s160] sm:$0x3]
    %v416 = vsub.f32 %v415, %v389
    %v417 = vmul.f32 %v416, 16.0
    %v418 = vround.ne.pseudo %v417
    %v419 = vmax.f32 %v418, -128.0
    %v420 = vmin.f32 %v419, 127.0
    %v421 = vmul.f32 %v420, 0.0625
    %s422 = scalar_lea.vmem [#allocation5], 6
    %423 = vst [vmem:[%s422] sm:$0x3] %v421
    %v424 = vld [vmem:[%s206] sm:$0x3]
    %v425 = vsub.f32 %v424, %v389
    %v426 = vmul.f32 %v425, 16.0
    %v427 = vround.ne.pseudo %v426
    %v428 = vmax.f32 %v427, -128.0
    %v429 = vmin.f32 %v428, 127.0
    %v430 = vmul.f32 %v429, 0.0625
    %s431 = scalar_lea.vmem [#allocation5], 8
    %432 = vst [vmem:[%s431] sm:$0x3] %v430
    %v433 = vld [vmem:[%s252] sm:$0x3]
    %v434 = vsub.f32 %v433, %v389
    %v435 = vmul.f32 %v434, 16.0
    %v436 = vround.ne.pseudo %v435
    %v437 = vmax.f32 %v436, -128.0
    %v438 = vmin.f32 %v437, 127.0
    %v439 = vmul.f32 %v438, 0.0625
    %s440 = scalar_lea.vmem [#allocation5], 10
    %441 = vst [vmem:[%s440] sm:$0x3] %v439
    %v442 = vld [vmem:[%s298] sm:$0x3]
    %v443 = vsub.f32 %v442, %v389
    %v444 = vmul.f32 %v443, 16.0
    %v445 = vround.ne.pseudo %v444
    %v446 = vmax.f32 %v445, -128.0
    %v447 = vmin.f32 %v446, 127.0
    %v448 = vmul.f32 %v447, 0.0625
    %s449 = scalar_lea.vmem [#allocation5], 12
    %450 = vst [vmem:[%s449] sm:$0x3] %v448
    %v451 = vld [vmem:[%s344] sm:$0x3]
    %v452 = vsub.f32 %v451, %v389
    %v453 = vmul.f32 %v452, 16.0
    %v454 = vround.ne.pseudo %v453
    %v455 = vmax.f32 %v454, -128.0
    %v456 = vmin.f32 %v455, 127.0
    %v457 = vmul.f32 %v456, 0.0625
    %s458 = scalar_lea.vmem [#allocation5], 14
    %459 = vst [vmem:[%s458] sm:$0x3] %v457
    // Predicated region
    $region10: #{tpu_custom_call.1} parent=1 // pred_check
      _
    $region11: #{tpu_custom_call.1} parent=1 // pred_check_branch
      %461 = sbr.rel (0) target = $region13
    $region12: #{tpu_custom_call.1} parent=1 // pred_region
      %s463 = ssub.s32 256, 256
      %464 = vsyncadd [#allocation4], %s463
      %s465 = sshll.u32 [#allocation5], 4
      %s466 = int_to_ptr.vmem [resolvable:$true] %s465
      %471 = dma.vmem_to_hbm [thread:$0]  %s466, 256, %s1, [#allocation4], 32, 32, 2
    $region13: #{tpu_custom_call.1} parent=1 // pred_fallthru
      _
    // Predicated region
    $region14: #{tpu_custom_call.1} parent=1 // pred_check
      _
    $region15: #{tpu_custom_call.1} parent=1 // pred_check_branch
      %473 = sbr.rel (0) target = $region17
    $region16: #{tpu_custom_call.1} parent=1 // pred_region
      %474 = dma.done [#allocation4], 256
    $region17: #{tpu_custom_call.1} parent=1 // pred_fallthru
      _
    %475 = vsyncpa [#allocation3], 1
    %476 = vsyncpa [#allocation4], 1

</llo_original>
